<compile_context>
chip_gen: v5e
topology: v5e:2x2
jax: 0.10.0
libtpu: 0.0.40
codegen_flags: <defaults>
</compile_context>

<pallas_src>
import functools

import jax
import jax.numpy as jnp
from jax import lax
from jax.experimental import pallas as pl
from jax.experimental.pallas import tpu as pltpu


# ----------------------------- model config (small) -------------------------
BATCH = 2
CONTEXT_LEN = 8          # T
VOCAB_SIZE = 64
WIDTH = 32               # transformer_width (d_model)
HEADS = 4
LAYERS = 2
EMBED_DIM = 16           # output projection dim
LN_EPS = 1e-5

# row indices inside the packed per-layer vector array nvec: (L, 8, W)
_LN1_W, _LN1_B, _B_OUT, _LN2_W, _LN2_B, _B_PRJ = 0, 1, 2, 3, 4, 5
# row indices inside the packed per-layer wide-bias array wvec: (L, 2, 4W)
_B_QKV, _B_FC = 0, 1


def _layernorm(v, w, b):
    # fp32 LayerNorm over last dim (matches the LayerNorm subclass: f32 math)
    mu = jnp.mean(v, axis=-1, keepdims=True)
    var = jnp.mean((v - mu) * (v - mu), axis=-1, keepdims=True)
    return (v - mu) * lax.rsqrt(var + LN_EPS) * w + b


# --------------------------- fused CLIPTEXT kernel ---------------------------
def cliptext_kernel(eot_ref,        # (B,) int32 in SMEM (scalar prefetch)
                    x_ref,          # (B*T, W) token + positional embeddings
                    wqkv_ref,       # (L, W, 3W)   in_proj_weight.T
                    wo_ref,         # (L, W, W)    out_proj.weight.T
                    wfc_ref,        # (L, W, 4W)   c_fc.weight.T
                    wpr_ref,        # (L, 4W, W)   c_proj.weight.T
                    nvec_ref,       # (L, 8, W)    packed LN scales/biases + small biases
                    wvec_ref,       # (L, 2, 4W)   packed in_proj bias / c_fc bias
                    lnf_ref,        # (2, W)       ln_final weight / bias
                    proj_ref,       # (W, E)       text_projection
                    o_ref,          # (B, E)
                    *, n_head, n_layer, batch, seq):
    B, T, H = batch, seq, n_head
    x = x_ref[...]                                  # (B*T, W), VMEM resident
    BT, W = x.shape
    dh = W // H
    scale = 1.0 / float(dh) ** 0.5

    # Causal mask built in-kernel once (finite large negative, not -inf).
    row = lax.broadcasted_iota(jnp.int32, (T, T), 0)
    col = lax.broadcasted_iota(jnp.int32, (T, T), 1)
    causal = jnp.where(col > row, jnp.float32(-1e30), jnp.float32(0.0))  # (T, T)

    for l in range(n_layer):                        # unrolled; weights stay in VMEM
        ln1_w = nvec_ref[l, _LN1_W:_LN1_W + 1, :]
        ln1_b = nvec_ref[l, _LN1_B:_LN1_B + 1, :]
        b_out = nvec_ref[l, _B_OUT:_B_OUT + 1, :]
        ln2_w = nvec_ref[l, _LN2_W:_LN2_W + 1, :]
        ln2_b = nvec_ref[l, _LN2_B:_LN2_B + 1, :]
        b_prj = nvec_ref[l, _B_PRJ:_B_PRJ + 1, :]
        b_qkv = wvec_ref[l, _B_QKV:_B_QKV + 1, :][:, 0:3 * W]   # (1, 3W)
        b_fc = wvec_ref[l, _B_FC:_B_FC + 1, :]                  # (1, 4W)

        # ---- attention branch: x + out_proj(MHA(ln_1(x))) ----
        xn = _layernorm(x, ln1_w, ln1_b)
        qkv = jnp.dot(xn, wqkv_ref[l], preferred_element_type=jnp.float32) + b_qkv
        q = qkv[:, 0 * W:1 * W] * scale
        k = qkv[:, 1 * W:2 * W]
        v = qkv[:, 2 * W:3 * W]
        wo_l = wo_ref[l]                            # (W, W)

        attn = jnp.zeros_like(x)
        for h in range(H):
            # Both batch elements in one batched dot_general per head; head
            # outputs are accumulated directly into the out-projection, so no
            # per-head concatenate (lane shuffle) is needed.
            qh = q[:, h * dh:(h + 1) * dh].reshape(B, T, dh)
            kh = k[:, h * dh:(h + 1) * dh].reshape(B, T, dh)
            vh = v[:, h * dh:(h + 1) * dh].reshape(B, T, dh)
            s = jnp.einsum('bqd,bkd->bqk', qh, kh,
                           preferred_element_type=jnp.float32) + causal[None]
            s = s - jnp.max(s, axis=-1, keepdims=True)
            p = jnp.exp(s)
            p = p * pl.reciprocal(jnp.sum(p, axis=-1, keepdims=True), approx=True)
            oh = jnp.einsum('bqk,bkd->bqd', p, vh,
                            preferred_element_type=jnp.float32).reshape(BT, dh)
            attn = attn + jnp.dot(oh, wo_l[h * dh:(h + 1) * dh, :],
                                  preferred_element_type=jnp.float32)
        x = x + attn + b_out

        # ---- MLP branch: x + c_proj(QuickGELU(c_fc(ln_2(x)))) ----
        xn2 = _layernorm(x, ln2_w, ln2_b)
        h1 = jnp.dot(xn2, wfc_ref[l], preferred_element_type=jnp.float32) + b_fc
        h1 = h1 * jax.nn.sigmoid(1.702 * h1)        # QuickGELU
        h2 = jnp.dot(h1, wpr_ref[l], preferred_element_type=jnp.float32) + b_prj
        x = x + h2

    # ---- EOT-token gather: one-hot (built from SMEM indices) @ activations ----
    col1 = lax.broadcasted_iota(jnp.int32, (1, BT), 1)
    sel_rows = []
    for b in range(B):
        tgt = b * T + eot_ref[b]                    # scalar read from SMEM
        sel_rows.append((col1 == tgt).astype(jnp.float32))
    onehot = jnp.concatenate(sel_rows, axis=0)      # (B, B*T)
    x_eot = jnp.dot(onehot, x, preferred_element_type=jnp.float32)   # (B, W)

    # ---- ln_final + text_projection (LN is per-row, so gather-first is exact) ----
    xf = _layernorm(x_eot, lnf_ref[0:1, :], lnf_ref[1:2, :])
    o_ref[...] = jnp.dot(xf, proj_ref[...], preferred_element_type=jnp.float32)


def cliptext_forward(x_flat, eot_idx, params):
    BT, W = x_flat.shape
    B = eot_idx.shape[0]
    T = BT // B
    L = params["wqkv_t"].shape[0]
    E = params["text_projection"].shape[1]

    def spec(shape):
        if len(shape) == 2:
            return pl.BlockSpec(shape, lambda i, eot: (0, 0))
        return pl.BlockSpec(shape, lambda i, eot: (0, 0, 0))

    inputs = (x_flat, params["wqkv_t"], params["wo_t"], params["wfc_t"],
              params["wpr_t"], params["nvec"], params["wvec"],
              params["lnf"], params["text_projection"])

    grid_spec = pltpu.PrefetchScalarGridSpec(
        num_scalar_prefetch=1,
        grid=(1,),
        in_specs=[spec(a.shape) for a in inputs],
        out_specs=pl.BlockSpec((B, E), lambda i, eot: (0, 0)),
    )
    return pl.pallas_call(
        functools.partial(cliptext_kernel, n_head=HEADS, n_layer=L,
                          batch=B, seq=T),
        grid_spec=grid_spec,
        out_shape=jax.ShapeDtypeStruct((B, E), jnp.float32),
        compiler_params=pltpu.CompilerParams(
            dimension_semantics=("arbitrary",)),
    )(eot_idx, *inputs)


# ------------------------------ parameter init -------------------------------
def init_params(key):
    keys = jax.random.split(key, 3 + 4 * LAYERS)

    proj_std = (WIDTH ** -0.5) * ((2 * LAYERS) ** -0.5)
    attn_std = WIDTH ** -0.5
    fc_std = (2 * WIDTH) ** -0.5

    params = {
        "token_embedding": jax.random.normal(keys[0], (VOCAB_SIZE, WIDTH),
                                             jnp.float32) * 0.02,
        "positional_embedding": jax.random.normal(keys[1], (CONTEXT_LEN, WIDTH),
                                                  jnp.float32) * 0.01,
        "text_projection": jax.random.normal(keys[2], (WIDTH, EMBED_DIM),
                                             jnp.float32) * (WIDTH ** -0.5),
    }

    wqkv, wo, wfc, wpr = [], [], [], []
    for l in range(LAYERS):
        k0, k1, k2, k3 = keys[3 + 4 * l: 3 + 4 * (l + 1)]
        wqkv.append(jax.random.normal(k0, (3 * WIDTH, WIDTH), jnp.float32).T * attn_std)
        wo.append(jax.random.normal(k1, (WIDTH, WIDTH), jnp.float32).T * proj_std)
        wfc.append(jax.random.normal(k2, (4 * WIDTH, WIDTH), jnp.float32).T * fc_std)
        wpr.append(jax.random.normal(k3, (WIDTH, 4 * WIDTH), jnp.float32).T * proj_std)

    params["wqkv_t"] = jnp.stack(wqkv)     # (L, W, 3W)  in_proj_weight.T
    params["wo_t"] = jnp.stack(wo)         # (L, W, W)   out_proj.weight.T
    params["wfc_t"] = jnp.stack(wfc)       # (L, W, 4W)  c_fc.weight.T
    params["wpr_t"] = jnp.stack(wpr)       # (L, 4W, W)  c_proj.weight.T

    # Packed per-layer LN scales/biases + small biases (rows: ln1_w, ln1_b,
    # out_proj bias, ln2_w, ln2_b, c_proj bias, pad, pad).
    nvec = jnp.zeros((LAYERS, 8, WIDTH), jnp.float32)
    nvec = nvec.at[:, _LN1_W, :].set(1.0).at[:, _LN2_W, :].set(1.0)
    params["nvec"] = nvec
    # Packed per-layer wide biases: row 0 = in_proj_bias (3W, zero-padded),
    # row 1 = c_fc bias (4W). Both zero at init (matches PyTorch defaults used).
    params["wvec"] = jnp.zeros((LAYERS, 2, 4 * WIDTH), jnp.float32)
    # ln_final: row 0 = weight (ones), row 1 = bias (zeros)
    params["lnf"] = jnp.concatenate(
        [jnp.ones((1, WIDTH), jnp.float32), jnp.zeros((1, WIDTH), jnp.float32)],
        axis=0)
    return params


# -------------------------------- encode_text --------------------------------
def encode_text(text_ids, params):
    # token embedding gather + positional add (tiny glue, stays in plain JAX)
    x = jnp.take(params["token_embedding"], text_ids, axis=0)        # (B, T, W)
    x = x + params["positional_embedding"][None, :, :]
    x_flat = x.reshape(-1, WIDTH)                                     # (B*T, W)
    # EOT token = largest id (CLIP convention); indices go to SMEM via prefetch
    eot_idx = jnp.argmax(text_ids, axis=-1).astype(jnp.int32)         # (B,)
    return cliptext_forward(x_flat, eot_idx, params)


if __name__ == "__main__":
    key = jax.random.PRNGKey(0)
    k_param, k_tok = jax.random.split(key)
    params = init_params(k_param)

    # deterministic "tokenized" input (stands in for tokenize(captions))
    text_ids = jax.random.randint(k_tok, (BATCH, CONTEXT_LEN), 0, VOCAB_SIZE,
                                  dtype=jnp.int32)

    feats = jax.block_until_ready(encode_text(text_ids, params))
    assert feats.shape == (BATCH, EMBED_DIM)
    assert feats.dtype == jnp.float32
    assert bool(jnp.all(jnp.isfinite(feats)))
    print("KERNEL_OK")
</pallas_src>

<mosaic_0001>
module attributes {stable_mosaic.version = 11 : i64} {
  func.func @cliptext_kernel(%arg0: i32, %arg1: memref<2xi32, #tpu.memory_space<smem>>, %arg2: memref<16x32xf32, #tpu.memory_space<vmem>>, %arg3: memref<2x32x96xf32, #tpu.memory_space<vmem>>, %arg4: memref<2x32x32xf32, #tpu.memory_space<vmem>>, %arg5: memref<2x32x128xf32, #tpu.memory_space<vmem>>, %arg6: memref<2x128x32xf32, #tpu.memory_space<vmem>>, %arg7: memref<2x8x32xf32, #tpu.memory_space<vmem>>, %arg8: memref<2x2x128xf32, #tpu.memory_space<vmem>>, %arg9: memref<2x32xf32, #tpu.memory_space<vmem>>, %arg10: memref<32x16xf32, #tpu.memory_space<vmem>>, %arg11: memref<2x16xf32, #tpu.memory_space<vmem>>) attributes {dimension_semantics = [#tpu.dimension_semantics<arbitrary>], iteration_bounds = array<i64: 1>, scalar_prefetch = 1 : i64, scratch_operands = 0 : i64, tpu.core_type = #tpu.core_type<tc>, window_params = [{pipeline_mode = #tpu.pipeline_mode<synchronous>, transform_indices = @transform_0, window_bounds = array<i64: 16, 32>}, {pipeline_mode = #tpu.pipeline_mode<synchronous>, transform_indices = @transform_1, window_bounds = array<i64: 2, 32, 96>}, {pipeline_mode = #tpu.pipeline_mode<synchronous>, transform_indices = @transform_2, window_bounds = array<i64: 2, 32, 32>}, {pipeline_mode = #tpu.pipeline_mode<synchronous>, transform_indices = @transform_3, window_bounds = array<i64: 2, 32, 128>}, {pipeline_mode = #tpu.pipeline_mode<synchronous>, transform_indices = @transform_4, window_bounds = array<i64: 2, 128, 32>}, {pipeline_mode = #tpu.pipeline_mode<synchronous>, transform_indices = @transform_5, window_bounds = array<i64: 2, 8, 32>}, {pipeline_mode = #tpu.pipeline_mode<synchronous>, transform_indices = @transform_6, window_bounds = array<i64: 2, 2, 128>}, {pipeline_mode = #tpu.pipeline_mode<synchronous>, transform_indices = @transform_7, window_bounds = array<i64: 2, 32>}, {pipeline_mode = #tpu.pipeline_mode<synchronous>, transform_indices = @transform_8, window_bounds = array<i64: 32, 16>}, {pipeline_mode = #tpu.pipeline_mode<synchronous>, transform_indices = @transform_9, window_bounds = array<i64: 2, 16>}]} {
    %c0 = arith.constant 0 : index
    %c0_0 = arith.constant 0 : index
    %0 = vector.load %arg2[%c0, %c0_0] : memref<16x32xf32, #tpu.memory_space<vmem>>, vector<16x32xf32>
    %1 = tpu.iota {dimensions = array<i32: 0>} : vector<8x8xi32>
    %2 = tpu.iota {dimensions = array<i32: 1>} : vector<8x8xi32>
    %3 = arith.cmpi sgt, %2, %1 : vector<8x8xi32>
    %cst = arith.constant -1.000000e+30 : f32
    %cst_1 = arith.constant 0.000000e+00 : f32
    %4 = vector.broadcast %cst : f32 to vector<8x8xf32>
    %5 = vector.broadcast %cst_1 : f32 to vector<8x8xf32>
    %6 = arith.select %3, %4, %5 : vector<8x8xi1>, vector<8x8xf32>
    %c0_2 = arith.constant 0 : index
    %c0_3 = arith.constant 0 : index
    %c0_4 = arith.constant 0 : index
    %7 = vector.load %arg7[%c0_2, %c0_3, %c0_4] : memref<2x8x32xf32, #tpu.memory_space<vmem>>, vector<1x1x32xf32>
    %8 = vector.shape_cast %7 : vector<1x1x32xf32> to vector<1x32xf32>
    %c0_5 = arith.constant 0 : index
    %c1 = arith.constant 1 : index
    %c0_6 = arith.constant 0 : index
    %9 = vector.load %arg7[%c0_5, %c1, %c0_6] : memref<2x8x32xf32, #tpu.memory_space<vmem>>, vector<1x1x32xf32>
    %10 = vector.shape_cast %9 : vector<1x1x32xf32> to vector<1x32xf32>
    %c0_7 = arith.constant 0 : index
    %c2 = arith.constant 2 : index
    %c0_8 = arith.constant 0 : index
    %11 = vector.load %arg7[%c0_7, %c2, %c0_8] : memref<2x8x32xf32, #tpu.memory_space<vmem>>, vector<1x1x32xf32>
    %12 = vector.shape_cast %11 : vector<1x1x32xf32> to vector<1x32xf32>
    %c0_9 = arith.constant 0 : index
    %c3 = arith.constant 3 : index
    %c0_10 = arith.constant 0 : index
    %13 = vector.load %arg7[%c0_9, %c3, %c0_10] : memref<2x8x32xf32, #tpu.memory_space<vmem>>, vector<1x1x32xf32>
    %14 = vector.shape_cast %13 : vector<1x1x32xf32> to vector<1x32xf32>
    %c0_11 = arith.constant 0 : index
    %c4 = arith.constant 4 : index
    %c0_12 = arith.constant 0 : index
    %15 = vector.load %arg7[%c0_11, %c4, %c0_12] : memref<2x8x32xf32, #tpu.memory_space<vmem>>, vector<1x1x32xf32>
    %16 = vector.shape_cast %15 : vector<1x1x32xf32> to vector<1x32xf32>
    %c0_13 = arith.constant 0 : index
    %c5 = arith.constant 5 : index
    %c0_14 = arith.constant 0 : index
    %17 = vector.load %arg7[%c0_13, %c5, %c0_14] : memref<2x8x32xf32, #tpu.memory_space<vmem>>, vector<1x1x32xf32>
    %18 = vector.shape_cast %17 : vector<1x1x32xf32> to vector<1x32xf32>
    %c0_15 = arith.constant 0 : index
    %c0_16 = arith.constant 0 : index
    %c0_17 = arith.constant 0 : index
    %19 = vector.load %arg8[%c0_15, %c0_16, %c0_17] : memref<2x2x128xf32, #tpu.memory_space<vmem>>, vector<1x1x128xf32>
    %20 = vector.shape_cast %19 : vector<1x1x128xf32> to vector<1x128xf32>
    %21 = vector.extract_strided_slice %20 {offsets = [0, 0], sizes = [1, 96], strides = [1, 1]} : vector<1x128xf32> to vector<1x96xf32>
    %c0_18 = arith.constant 0 : index
    %c1_19 = arith.constant 1 : index
    %c0_20 = arith.constant 0 : index
    %22 = vector.load %arg8[%c0_18, %c1_19, %c0_20] : memref<2x2x128xf32, #tpu.memory_space<vmem>>, vector<1x1x128xf32>
    %23 = vector.shape_cast %22 : vector<1x1x128xf32> to vector<1x128xf32>
    %cst_21 = arith.constant dense<0.000000e+00> : vector<16xf32>
    %24 = vector.multi_reduction <add>, %0, %cst_21 [1] : vector<16x32xf32> to vector<16xf32>
    %25 = vector.shape_cast %24 : vector<16xf32> to vector<16x1xf32>
    %cst_22 = arith.constant 3.200000e+01 : f32
    %26 = vector.broadcast %cst_22 : f32 to vector<16x1xf32>
    %27 = arith.divf %25, %26 : vector<16x1xf32>
    %28 = vector.broadcast %27 : vector<16x1xf32> to vector<16x32xf32>
    %29 = arith.subf %0, %28 : vector<16x32xf32>
    %30 = vector.broadcast %27 : vector<16x1xf32> to vector<16x32xf32>
    %31 = arith.subf %0, %30 : vector<16x32xf32>
    %32 = arith.mulf %29, %31 : vector<16x32xf32>
    %cst_23 = arith.constant dense<0.000000e+00> : vector<16xf32>
    %33 = vector.multi_reduction <add>, %32, %cst_23 [1] : vector<16x32xf32> to vector<16xf32>
    %34 = vector.shape_cast %33 : vector<16xf32> to vector<16x1xf32>
    %cst_24 = arith.constant 3.200000e+01 : f32
    %35 = vector.broadcast %cst_24 : f32 to vector<16x1xf32>
    %36 = arith.divf %34, %35 : vector<16x1xf32>
    %37 = vector.broadcast %27 : vector<16x1xf32> to vector<16x32xf32>
    %38 = arith.subf %0, %37 : vector<16x32xf32>
    %cst_25 = arith.constant 9.99999974E-6 : f32
    %39 = vector.broadcast %cst_25 : f32 to vector<16x1xf32>
    %40 = arith.addf %36, %39 : vector<16x1xf32>
    %41 = math.rsqrt %40 : vector<16x1xf32>
    %42 = vector.broadcast %41 : vector<16x1xf32> to vector<16x32xf32>
    %43 = arith.mulf %38, %42 : vector<16x32xf32>
    %44 = vector.broadcast %8 : vector<1x32xf32> to vector<16x32xf32>
    %45 = arith.mulf %43, %44 : vector<16x32xf32>
    %46 = vector.broadcast %10 : vector<1x32xf32> to vector<16x32xf32>
    %47 = arith.addf %45, %46 : vector<16x32xf32>
    %c0_26 = arith.constant 0 : index
    %c0_27 = arith.constant 0 : index
    %c0_28 = arith.constant 0 : index
    %48 = vector.load %arg3[%c0_26, %c0_27, %c0_28] : memref<2x32x96xf32, #tpu.memory_space<vmem>>, vector<1x32x96xf32>
    %49 = vector.shape_cast %48 : vector<1x32x96xf32> to vector<32x96xf32>
    %cst_29 = arith.constant dense<0.000000e+00> : vector<16x96xf32>
    %50 = tpu.matmul %47, %49, %cst_29 {dimension_numbers = #tpu.dot_dimension_numbers<[1], [0], [0], [1], [0, 0, 1, 1], [], []>} : vector<16x32xf32>, vector<32x96xf32>, vector<16x96xf32> -> vector<16x96xf32>
    %51 = vector.broadcast %21 : vector<1x96xf32> to vector<16x96xf32>
    %52 = arith.addf %50, %51 : vector<16x96xf32>
    %53 = vector.extract_strided_slice %52 {offsets = [0, 0], sizes = [16, 32], strides = [1, 1]} : vector<16x96xf32> to vector<16x32xf32>
    %cst_30 = arith.constant 0.353553385 : f32
    %54 = vector.broadcast %cst_30 : f32 to vector<16x32xf32>
    %55 = arith.mulf %53, %54 : vector<16x32xf32>
    %56 = vector.extract_strided_slice %52 {offsets = [0, 32], sizes = [16, 32], strides = [1, 1]} : vector<16x96xf32> to vector<16x32xf32>
    %57 = vector.extract_strided_slice %52 {offsets = [0, 64], sizes = [16, 32], strides = [1, 1]} : vector<16x96xf32> to vector<16x32xf32>
    %c0_31 = arith.constant 0 : index
    %c0_32 = arith.constant 0 : index
    %c0_33 = arith.constant 0 : index
    %58 = vector.load %arg4[%c0_31, %c0_32, %c0_33] : memref<2x32x32xf32, #tpu.memory_space<vmem>>, vector<1x32x32xf32>
    %59 = vector.shape_cast %58 : vector<1x32x32xf32> to vector<32x32xf32>
    %cst_34 = arith.constant 0.000000e+00 : f32
    %60 = vector.broadcast %cst_34 : f32 to vector<16x32xf32>
    %61 = vector.extract_strided_slice %55 {offsets = [0, 0], sizes = [16, 8], strides = [1, 1]} : vector<16x32xf32> to vector<16x8xf32>
    %62 = vector.shape_cast %61 : vector<16x8xf32> to vector<2x8x8xf32>
    %63 = vector.extract_strided_slice %56 {offsets = [0, 0], sizes = [16, 8], strides = [1, 1]} : vector<16x32xf32> to vector<16x8xf32>
    %64 = vector.shape_cast %63 : vector<16x8xf32> to vector<2x8x8xf32>
    %65 = vector.extract_strided_slice %57 {offsets = [0, 0], sizes = [16, 8], strides = [1, 1]} : vector<16x32xf32> to vector<16x8xf32>
    %66 = vector.shape_cast %65 : vector<16x8xf32> to vector<2x8x8xf32>
    "tpu.trace_start"() <{level = 10 : i32, message = "bqd,bkd->bqk"}> : () -> ()
    %cst_35 = arith.constant dense<0.000000e+00> : vector<2x8x8xf32>
    %67 = tpu.matmul %62, %64, %cst_35 {dimension_numbers = #tpu.dot_dimension_numbers<[2], [2], [1], [1], [0, 0, 0, 1, 1, 1], [0], [0]>} : vector<2x8x8xf32>, vector<2x8x8xf32>, vector<2x8x8xf32> -> vector<2x8x8xf32>
    "tpu.trace_stop"() : () -> ()
    %68 = vector.shape_cast %6 : vector<8x8xf32> to vector<1x8x8xf32>
    %69 = vector.broadcast %68 : vector<1x8x8xf32> to vector<2x8x8xf32>
    %70 = arith.addf %67, %69 : vector<2x8x8xf32>
    %cst_36 = arith.constant dense<0xFF800000> : vector<2x8xf32>
    %71 = vector.multi_reduction <maximumf>, %70, %cst_36 [2] : vector<2x8x8xf32> to vector<2x8xf32>
    %72 = vector.shape_cast %71 : vector<2x8xf32> to vector<2x8x1xf32>
    %73 = vector.broadcast %72 : vector<2x8x1xf32> to vector<2x8x8xf32>
    %74 = arith.subf %70, %73 : vector<2x8x8xf32>
    %75 = math.exp %74 : vector<2x8x8xf32>
    %cst_37 = arith.constant dense<0.000000e+00> : vector<2x8xf32>
    %76 = vector.multi_reduction <add>, %75, %cst_37 [2] : vector<2x8x8xf32> to vector<2x8xf32>
    %77 = vector.shape_cast %76 : vector<2x8xf32> to vector<2x8x1xf32>
    %78 = tpu.reciprocal %77 {approx = true} : vector<2x8x1xf32> -> vector<2x8x1xf32>
    %79 = vector.broadcast %78 : vector<2x8x1xf32> to vector<2x8x8xf32>
    %80 = arith.mulf %75, %79 : vector<2x8x8xf32>
    "tpu.trace_start"() <{level = 10 : i32, message = "bqk,bkd->bqd"}> : () -> ()
    %cst_38 = arith.constant dense<0.000000e+00> : vector<2x8x8xf32>
    %81 = tpu.matmul %80, %66, %cst_38 {dimension_numbers = #tpu.dot_dimension_numbers<[2], [1], [1], [2], [0, 0, 0, 1, 1, 2], [0], [0]>} : vector<2x8x8xf32>, vector<2x8x8xf32>, vector<2x8x8xf32> -> vector<2x8x8xf32>
    "tpu.trace_stop"() : () -> ()
    %82 = vector.shape_cast %81 : vector<2x8x8xf32> to vector<16x8xf32>
    %83 = vector.extract_strided_slice %59 {offsets = [0, 0], sizes = [8, 32], strides = [1, 1]} : vector<32x32xf32> to vector<8x32xf32>
    %cst_39 = arith.constant dense<0.000000e+00> : vector<16x32xf32>
    %84 = tpu.matmul %82, %83, %cst_39 {dimension_numbers = #tpu.dot_dimension_numbers<[1], [0], [0], [1], [0, 0, 1, 1], [], []>} : vector<16x8xf32>, vector<8x32xf32>, vector<16x32xf32> -> vector<16x32xf32>
    %85 = arith.addf %60, %84 : vector<16x32xf32>
    %86 = vector.extract_strided_slice %55 {offsets = [0, 8], sizes = [16, 8], strides = [1, 1]} : vector<16x32xf32> to vector<16x8xf32>
    %87 = vector.shape_cast %86 : vector<16x8xf32> to vector<2x8x8xf32>
    %88 = vector.extract_strided_slice %56 {offsets = [0, 8], sizes = [16, 8], strides = [1, 1]} : vector<16x32xf32> to vector<16x8xf32>
    %89 = vector.shape_cast %88 : vector<16x8xf32> to vector<2x8x8xf32>
    %90 = vector.extract_strided_slice %57 {offsets = [0, 8], sizes = [16, 8], strides = [1, 1]} : vector<16x32xf32> to vector<16x8xf32>
    %91 = vector.shape_cast %90 : vector<16x8xf32> to vector<2x8x8xf32>
    "tpu.trace_start"() <{level = 10 : i32, message = "bqd,bkd->bqk"}> : () -> ()
    %cst_40 = arith.constant dense<0.000000e+00> : vector<2x8x8xf32>
    %92 = tpu.matmul %87, %89, %cst_40 {dimension_numbers = #tpu.dot_dimension_numbers<[2], [2], [1], [1], [0, 0, 0, 1, 1, 1], [0], [0]>} : vector<2x8x8xf32>, vector<2x8x8xf32>, vector<2x8x8xf32> -> vector<2x8x8xf32>
    "tpu.trace_stop"() : () -> ()
    %93 = vector.shape_cast %6 : vector<8x8xf32> to vector<1x8x8xf32>
    %94 = vector.broadcast %93 : vector<1x8x8xf32> to vector<2x8x8xf32>
    %95 = arith.addf %92, %94 : vector<2x8x8xf32>
    %cst_41 = arith.constant dense<0xFF800000> : vector<2x8xf32>
    %96 = vector.multi_reduction <maximumf>, %95, %cst_41 [2] : vector<2x8x8xf32> to vector<2x8xf32>
    %97 = vector.shape_cast %96 : vector<2x8xf32> to vector<2x8x1xf32>
    %98 = vector.broadcast %97 : vector<2x8x1xf32> to vector<2x8x8xf32>
    %99 = arith.subf %95, %98 : vector<2x8x8xf32>
    %100 = math.exp %99 : vector<2x8x8xf32>
    %cst_42 = arith.constant dense<0.000000e+00> : vector<2x8xf32>
    %101 = vector.multi_reduction <add>, %100, %cst_42 [2] : vector<2x8x8xf32> to vector<2x8xf32>
    %102 = vector.shape_cast %101 : vector<2x8xf32> to vector<2x8x1xf32>
    %103 = tpu.reciprocal %102 {approx = true} : vector<2x8x1xf32> -> vector<2x8x1xf32>
    %104 = vector.broadcast %103 : vector<2x8x1xf32> to vector<2x8x8xf32>
    %105 = arith.mulf %100, %104 : vector<2x8x8xf32>
    "tpu.trace_start"() <{level = 10 : i32, message = "bqk,bkd->bqd"}> : () -> ()
    %cst_43 = arith.constant dense<0.000000e+00> : vector<2x8x8xf32>
    %106 = tpu.matmul %105, %91, %cst_43 {dimension_numbers = #tpu.dot_dimension_numbers<[2], [1], [1], [2], [0, 0, 0, 1, 1, 2], [0], [0]>} : vector<2x8x8xf32>, vector<2x8x8xf32>, vector<2x8x8xf32> -> vector<2x8x8xf32>
    "tpu.trace_stop"() : () -> ()
    %107 = vector.shape_cast %106 : vector<2x8x8xf32> to vector<16x8xf32>
    %108 = vector.extract_strided_slice %59 {offsets = [8, 0], sizes = [8, 32], strides = [1, 1]} : vector<32x32xf32> to vector<8x32xf32>
    %cst_44 = arith.constant dense<0.000000e+00> : vector<16x32xf32>
    %109 = tpu.matmul %107, %108, %cst_44 {dimension_numbers = #tpu.dot_dimension_numbers<[1], [0], [0], [1], [0, 0, 1, 1], [], []>} : vector<16x8xf32>, vector<8x32xf32>, vector<16x32xf32> -> vector<16x32xf32>
    %110 = arith.addf %85, %109 : vector<16x32xf32>
    %111 = vector.extract_strided_slice %55 {offsets = [0, 16], sizes = [16, 8], strides = [1, 1]} : vector<16x32xf32> to vector<16x8xf32>
    %112 = vector.shape_cast %111 : vector<16x8xf32> to vector<2x8x8xf32>
    %113 = vector.extract_strided_slice %56 {offsets = [0, 16], sizes = [16, 8], strides = [1, 1]} : vector<16x32xf32> to vector<16x8xf32>
    %114 = vector.shape_cast %113 : vector<16x8xf32> to vector<2x8x8xf32>
    %115 = vector.extract_strided_slice %57 {offsets = [0, 16], sizes = [16, 8], strides = [1, 1]} : vector<16x32xf32> to vector<16x8xf32>
    %116 = vector.shape_cast %115 : vector<16x8xf32> to vector<2x8x8xf32>
    "tpu.trace_start"() <{level = 10 : i32, message = "bqd,bkd->bqk"}> : () -> ()
    %cst_45 = arith.constant dense<0.000000e+00> : vector<2x8x8xf32>
    %117 = tpu.matmul %112, %114, %cst_45 {dimension_numbers = #tpu.dot_dimension_numbers<[2], [2], [1], [1], [0, 0, 0, 1, 1, 1], [0], [0]>} : vector<2x8x8xf32>, vector<2x8x8xf32>, vector<2x8x8xf32> -> vector<2x8x8xf32>
    "tpu.trace_stop"() : () -> ()
    %118 = vector.shape_cast %6 : vector<8x8xf32> to vector<1x8x8xf32>
    %119 = vector.broadcast %118 : vector<1x8x8xf32> to vector<2x8x8xf32>
    %120 = arith.addf %117, %119 : vector<2x8x8xf32>
    %cst_46 = arith.constant dense<0xFF800000> : vector<2x8xf32>
    %121 = vector.multi_reduction <maximumf>, %120, %cst_46 [2] : vector<2x8x8xf32> to vector<2x8xf32>
    %122 = vector.shape_cast %121 : vector<2x8xf32> to vector<2x8x1xf32>
    %123 = vector.broadcast %122 : vector<2x8x1xf32> to vector<2x8x8xf32>
    %124 = arith.subf %120, %123 : vector<2x8x8xf32>
    %125 = math.exp %124 : vector<2x8x8xf32>
    %cst_47 = arith.constant dense<0.000000e+00> : vector<2x8xf32>
    %126 = vector.multi_reduction <add>, %125, %cst_47 [2] : vector<2x8x8xf32> to vector<2x8xf32>
    %127 = vector.shape_cast %126 : vector<2x8xf32> to vector<2x8x1xf32>
    %128 = tpu.reciprocal %127 {approx = true} : vector<2x8x1xf32> -> vector<2x8x1xf32>
    %129 = vector.broadcast %128 : vector<2x8x1xf32> to vector<2x8x8xf32>
    %130 = arith.mulf %125, %129 : vector<2x8x8xf32>
    "tpu.trace_start"() <{level = 10 : i32, message = "bqk,bkd->bqd"}> : () -> ()
    %cst_48 = arith.constant dense<0.000000e+00> : vector<2x8x8xf32>
    %131 = tpu.matmul %130, %116, %cst_48 {dimension_numbers = #tpu.dot_dimension_numbers<[2], [1], [1], [2], [0, 0, 0, 1, 1, 2], [0], [0]>} : vector<2x8x8xf32>, vector<2x8x8xf32>, vector<2x8x8xf32> -> vector<2x8x8xf32>
    "tpu.trace_stop"() : () -> ()
    %132 = vector.shape_cast %131 : vector<2x8x8xf32> to vector<16x8xf32>
    %133 = vector.extract_strided_slice %59 {offsets = [16, 0], sizes = [8, 32], strides = [1, 1]} : vector<32x32xf32> to vector<8x32xf32>
    %cst_49 = arith.constant dense<0.000000e+00> : vector<16x32xf32>
    %134 = tpu.matmul %132, %133, %cst_49 {dimension_numbers = #tpu.dot_dimension_numbers<[1], [0], [0], [1], [0, 0, 1, 1], [], []>} : vector<16x8xf32>, vector<8x32xf32>, vector<16x32xf32> -> vector<16x32xf32>
    %135 = arith.addf %110, %134 : vector<16x32xf32>
    %136 = vector.extract_strided_slice %55 {offsets = [0, 24], sizes = [16, 8], strides = [1, 1]} : vector<16x32xf32> to vector<16x8xf32>
    %137 = vector.shape_cast %136 : vector<16x8xf32> to vector<2x8x8xf32>
    %138 = vector.extract_strided_slice %56 {offsets = [0, 24], sizes = [16, 8], strides = [1, 1]} : vector<16x32xf32> to vector<16x8xf32>
    %139 = vector.shape_cast %138 : vector<16x8xf32> to vector<2x8x8xf32>
    %140 = vector.extract_strided_slice %57 {offsets = [0, 24], sizes = [16, 8], strides = [1, 1]} : vector<16x32xf32> to vector<16x8xf32>
    %141 = vector.shape_cast %140 : vector<16x8xf32> to vector<2x8x8xf32>
    "tpu.trace_start"() <{level = 10 : i32, message = "bqd,bkd->bqk"}> : () -> ()
    %cst_50 = arith.constant dense<0.000000e+00> : vector<2x8x8xf32>
    %142 = tpu.matmul %137, %139, %cst_50 {dimension_numbers = #tpu.dot_dimension_numbers<[2], [2], [1], [1], [0, 0, 0, 1, 1, 1], [0], [0]>} : vector<2x8x8xf32>, vector<2x8x8xf32>, vector<2x8x8xf32> -> vector<2x8x8xf32>
    "tpu.trace_stop"() : () -> ()
    %143 = vector.shape_cast %6 : vector<8x8xf32> to vector<1x8x8xf32>
    %144 = vector.broadcast %143 : vector<1x8x8xf32> to vector<2x8x8xf32>
    %145 = arith.addf %142, %144 : vector<2x8x8xf32>
    %cst_51 = arith.constant dense<0xFF800000> : vector<2x8xf32>
    %146 = vector.multi_reduction <maximumf>, %145, %cst_51 [2] : vector<2x8x8xf32> to vector<2x8xf32>
    %147 = vector.shape_cast %146 : vector<2x8xf32> to vector<2x8x1xf32>
    %148 = vector.broadcast %147 : vector<2x8x1xf32> to vector<2x8x8xf32>
    %149 = arith.subf %145, %148 : vector<2x8x8xf32>
    %150 = math.exp %149 : vector<2x8x8xf32>
    %cst_52 = arith.constant dense<0.000000e+00> : vector<2x8xf32>
    %151 = vector.multi_reduction <add>, %150, %cst_52 [2] : vector<2x8x8xf32> to vector<2x8xf32>
    %152 = vector.shape_cast %151 : vector<2x8xf32> to vector<2x8x1xf32>
    %153 = tpu.reciprocal %152 {approx = true} : vector<2x8x1xf32> -> vector<2x8x1xf32>
    %154 = vector.broadcast %153 : vector<2x8x1xf32> to vector<2x8x8xf32>
    %155 = arith.mulf %150, %154 : vector<2x8x8xf32>
    "tpu.trace_start"() <{level = 10 : i32, message = "bqk,bkd->bqd"}> : () -> ()
    %cst_53 = arith.constant dense<0.000000e+00> : vector<2x8x8xf32>
    %156 = tpu.matmul %155, %141, %cst_53 {dimension_numbers = #tpu.dot_dimension_numbers<[2], [1], [1], [2], [0, 0, 0, 1, 1, 2], [0], [0]>} : vector<2x8x8xf32>, vector<2x8x8xf32>, vector<2x8x8xf32> -> vector<2x8x8xf32>
    "tpu.trace_stop"() : () -> ()
    %157 = vector.shape_cast %156 : vector<2x8x8xf32> to vector<16x8xf32>
    %158 = vector.extract_strided_slice %59 {offsets = [24, 0], sizes = [8, 32], strides = [1, 1]} : vector<32x32xf32> to vector<8x32xf32>
    %cst_54 = arith.constant dense<0.000000e+00> : vector<16x32xf32>
    %159 = tpu.matmul %157, %158, %cst_54 {dimension_numbers = #tpu.dot_dimension_numbers<[1], [0], [0], [1], [0, 0, 1, 1], [], []>} : vector<16x8xf32>, vector<8x32xf32>, vector<16x32xf32> -> vector<16x32xf32>
    %160 = arith.addf %135, %159 : vector<16x32xf32>
    %161 = arith.addf %0, %160 : vector<16x32xf32>
    %162 = vector.broadcast %12 : vector<1x32xf32> to vector<16x32xf32>
    %163 = arith.addf %161, %162 : vector<16x32xf32>
    %cst_55 = arith.constant dense<0.000000e+00> : vector<16xf32>
    %164 = vector.multi_reduction <add>, %163, %cst_55 [1] : vector<16x32xf32> to vector<16xf32>
    %165 = vector.shape_cast %164 : vector<16xf32> to vector<16x1xf32>
    %cst_56 = arith.constant 3.200000e+01 : f32
    %166 = vector.broadcast %cst_56 : f32 to vector<16x1xf32>
    %167 = arith.divf %165, %166 : vector<16x1xf32>
    %168 = vector.broadcast %167 : vector<16x1xf32> to vector<16x32xf32>
    %169 = arith.subf %163, %168 : vector<16x32xf32>
    %170 = vector.broadcast %167 : vector<16x1xf32> to vector<16x32xf32>
    %171 = arith.subf %163, %170 : vector<16x32xf32>
    %172 = arith.mulf %169, %171 : vector<16x32xf32>
    %cst_57 = arith.constant dense<0.000000e+00> : vector<16xf32>
    %173 = vector.multi_reduction <add>, %172, %cst_57 [1] : vector<16x32xf32> to vector<16xf32>
    %174 = vector.shape_cast %173 : vector<16xf32> to vector<16x1xf32>
    %cst_58 = arith.constant 3.200000e+01 : f32
    %175 = vector.broadcast %cst_58 : f32 to vector<16x1xf32>
    %176 = arith.divf %174, %175 : vector<16x1xf32>
    %177 = vector.broadcast %167 : vector<16x1xf32> to vector<16x32xf32>
    %178 = arith.subf %163, %177 : vector<16x32xf32>
    %cst_59 = arith.constant 9.99999974E-6 : f32
    %179 = vector.broadcast %cst_59 : f32 to vector<16x1xf32>
    %180 = arith.addf %176, %179 : vector<16x1xf32>
    %181 = math.rsqrt %180 : vector<16x1xf32>
    %182 = vector.broadcast %181 : vector<16x1xf32> to vector<16x32xf32>
    %183 = arith.mulf %178, %182 : vector<16x32xf32>
    %184 = vector.broadcast %14 : vector<1x32xf32> to vector<16x32xf32>
    %185 = arith.mulf %183, %184 : vector<16x32xf32>
    %186 = vector.broadcast %16 : vector<1x32xf32> to vector<16x32xf32>
    %187 = arith.addf %185, %186 : vector<16x32xf32>
    %c0_60 = arith.constant 0 : index
    %c0_61 = arith.constant 0 : index
    %c0_62 = arith.constant 0 : index
    %188 = vector.load %arg5[%c0_60, %c0_61, %c0_62] : memref<2x32x128xf32, #tpu.memory_space<vmem>>, vector<1x32x128xf32>
    %189 = vector.shape_cast %188 : vector<1x32x128xf32> to vector<32x128xf32>
    %cst_63 = arith.constant dense<0.000000e+00> : vector<16x128xf32>
    %190 = tpu.matmul %187, %189, %cst_63 {dimension_numbers = #tpu.dot_dimension_numbers<[1], [0], [0], [1], [0, 0, 1, 1], [], []>} : vector<16x32xf32>, vector<32x128xf32>, vector<16x128xf32> -> vector<16x128xf32>
    %191 = vector.broadcast %23 : vector<1x128xf32> to vector<16x128xf32>
    %192 = arith.addf %190, %191 : vector<16x128xf32>
    %cst_64 = arith.constant 1.702000e+00 : f32
    %193 = vector.broadcast %cst_64 : f32 to vector<16x128xf32>
    %194 = arith.mulf %193, %192 : vector<16x128xf32>
    %195 = arith.negf %194 : vector<16x128xf32>
    %196 = math.exp %195 : vector<16x128xf32>
    %cst_65 = arith.constant 1.000000e+00 : f32
    %197 = vector.broadcast %cst_65 : f32 to vector<16x128xf32>
    %198 = arith.addf %197, %196 : vector<16x128xf32>
    %199 = arith.divf %197, %198 : vector<16x128xf32>
    %200 = arith.mulf %192, %199 : vector<16x128xf32>
    %c0_66 = arith.constant 0 : index
    %c0_67 = arith.constant 0 : index
    %c0_68 = arith.constant 0 : index
    %201 = vector.load %arg6[%c0_66, %c0_67, %c0_68] : memref<2x128x32xf32, #tpu.memory_space<vmem>>, vector<1x128x32xf32>
    %202 = vector.shape_cast %201 : vector<1x128x32xf32> to vector<128x32xf32>
    %cst_69 = arith.constant dense<0.000000e+00> : vector<16x32xf32>
    %203 = tpu.matmul %200, %202, %cst_69 {dimension_numbers = #tpu.dot_dimension_numbers<[1], [0], [0], [1], [0, 0, 1, 1], [], []>} : vector<16x128xf32>, vector<128x32xf32>, vector<16x32xf32> -> vector<16x32xf32>
    %204 = vector.broadcast %18 : vector<1x32xf32> to vector<16x32xf32>
    %205 = arith.addf %203, %204 : vector<16x32xf32>
    %206 = arith.addf %163, %205 : vector<16x32xf32>
    %c1_70 = arith.constant 1 : index
    %c0_71 = arith.constant 0 : index
    %c0_72 = arith.constant 0 : index
    %207 = vector.load %arg7[%c1_70, %c0_71, %c0_72] : memref<2x8x32xf32, #tpu.memory_space<vmem>>, vector<1x1x32xf32>
    %208 = vector.shape_cast %207 : vector<1x1x32xf32> to vector<1x32xf32>
    %c1_73 = arith.constant 1 : index
    %c1_74 = arith.constant 1 : index
    %c0_75 = arith.constant 0 : index
    %209 = vector.load %arg7[%c1_73, %c1_74, %c0_75] : memref<2x8x32xf32, #tpu.memory_space<vmem>>, vector<1x1x32xf32>
    %210 = vector.shape_cast %209 : vector<1x1x32xf32> to vector<1x32xf32>
    %c1_76 = arith.constant 1 : index
    %c2_77 = arith.constant 2 : index
    %c0_78 = arith.constant 0 : index
    %211 = vector.load %arg7[%c1_76, %c2_77, %c0_78] : memref<2x8x32xf32, #tpu.memory_space<vmem>>, vector<1x1x32xf32>
    %212 = vector.shape_cast %211 : vector<1x1x32xf32> to vector<1x32xf32>
    %c1_79 = arith.constant 1 : index
    %c3_80 = arith.constant 3 : index
    %c0_81 = arith.constant 0 : index
    %213 = vector.load %arg7[%c1_79, %c3_80, %c0_81] : memref<2x8x32xf32, #tpu.memory_space<vmem>>, vector<1x1x32xf32>
    %214 = vector.shape_cast %213 : vector<1x1x32xf32> to vector<1x32xf32>
    %c1_82 = arith.constant 1 : index
    %c4_83 = arith.constant 4 : index
    %c0_84 = arith.constant 0 : index
    %215 = vector.load %arg7[%c1_82, %c4_83, %c0_84] : memref<2x8x32xf32, #tpu.memory_space<vmem>>, vector<1x1x32xf32>
    %216 = vector.shape_cast %215 : vector<1x1x32xf32> to vector<1x32xf32>
    %c1_85 = arith.constant 1 : index
    %c5_86 = arith.constant 5 : index
    %c0_87 = arith.constant 0 : index
    %217 = vector.load %arg7[%c1_85, %c5_86, %c0_87] : memref<2x8x32xf32, #tpu.memory_space<vmem>>, vector<1x1x32xf32>
    %218 = vector.shape_cast %217 : vector<1x1x32xf32> to vector<1x32xf32>
    %c1_88 = arith.constant 1 : index
    %c0_89 = arith.constant 0 : index
    %c0_90 = arith.constant 0 : index
    %219 = vector.load %arg8[%c1_88, %c0_89, %c0_90] : memref<2x2x128xf32, #tpu.memory_space<vmem>>, vector<1x1x128xf32>
    %220 = vector.shape_cast %219 : vector<1x1x128xf32> to vector<1x128xf32>
    %221 = vector.extract_strided_slice %220 {offsets = [0, 0], sizes = [1, 96], strides = [1, 1]} : vector<1x128xf32> to vector<1x96xf32>
    %c1_91 = arith.constant 1 : index
    %c1_92 = arith.constant 1 : index
    %c0_93 = arith.constant 0 : index
    %222 = vector.load %arg8[%c1_91, %c1_92, %c0_93] : memref<2x2x128xf32, #tpu.memory_space<vmem>>, vector<1x1x128xf32>
    %223 = vector.shape_cast %222 : vector<1x1x128xf32> to vector<1x128xf32>
    %cst_94 = arith.constant dense<0.000000e+00> : vector<16xf32>
    %224 = vector.multi_reduction <add>, %206, %cst_94 [1] : vector<16x32xf32> to vector<16xf32>
    %225 = vector.shape_cast %224 : vector<16xf32> to vector<16x1xf32>
    %cst_95 = arith.constant 3.200000e+01 : f32
    %226 = vector.broadcast %cst_95 : f32 to vector<16x1xf32>
    %227 = arith.divf %225, %226 : vector<16x1xf32>
    %228 = vector.broadcast %227 : vector<16x1xf32> to vector<16x32xf32>
    %229 = arith.subf %206, %228 : vector<16x32xf32>
    %230 = vector.broadcast %227 : vector<16x1xf32> to vector<16x32xf32>
    %231 = arith.subf %206, %230 : vector<16x32xf32>
    %232 = arith.mulf %229, %231 : vector<16x32xf32>
    %cst_96 = arith.constant dense<0.000000e+00> : vector<16xf32>
    %233 = vector.multi_reduction <add>, %232, %cst_96 [1] : vector<16x32xf32> to vector<16xf32>
    %234 = vector.shape_cast %233 : vector<16xf32> to vector<16x1xf32>
    %cst_97 = arith.constant 3.200000e+01 : f32
    %235 = vector.broadcast %cst_97 : f32 to vector<16x1xf32>
    %236 = arith.divf %234, %235 : vector<16x1xf32>
    %237 = vector.broadcast %227 : vector<16x1xf32> to vector<16x32xf32>
    %238 = arith.subf %206, %237 : vector<16x32xf32>
    %cst_98 = arith.constant 9.99999974E-6 : f32
    %239 = vector.broadcast %cst_98 : f32 to vector<16x1xf32>
    %240 = arith.addf %236, %239 : vector<16x1xf32>
    %241 = math.rsqrt %240 : vector<16x1xf32>
    %242 = vector.broadcast %241 : vector<16x1xf32> to vector<16x32xf32>
    %243 = arith.mulf %238, %242 : vector<16x32xf32>
    %244 = vector.broadcast %208 : vector<1x32xf32> to vector<16x32xf32>
    %245 = arith.mulf %243, %244 : vector<16x32xf32>
    %246 = vector.broadcast %210 : vector<1x32xf32> to vector<16x32xf32>
    %247 = arith.addf %245, %246 : vector<16x32xf32>
    %c1_99 = arith.constant 1 : index
    %c0_100 = arith.constant 0 : index
    %c0_101 = arith.constant 0 : index
    %248 = vector.load %arg3[%c1_99, %c0_100, %c0_101] : memref<2x32x96xf32, #tpu.memory_space<vmem>>, vector<1x32x96xf32>
    %249 = vector.shape_cast %248 : vector<1x32x96xf32> to vector<32x96xf32>
    %cst_102 = arith.constant dense<0.000000e+00> : vector<16x96xf32>
    %250 = tpu.matmul %247, %249, %cst_102 {dimension_numbers = #tpu.dot_dimension_numbers<[1], [0], [0], [1], [0, 0, 1, 1], [], []>} : vector<16x32xf32>, vector<32x96xf32>, vector<16x96xf32> -> vector<16x96xf32>
    %251 = vector.broadcast %221 : vector<1x96xf32> to vector<16x96xf32>
    %252 = arith.addf %250, %251 : vector<16x96xf32>
    %253 = vector.extract_strided_slice %252 {offsets = [0, 0], sizes = [16, 32], strides = [1, 1]} : vector<16x96xf32> to vector<16x32xf32>
    %cst_103 = arith.constant 0.353553385 : f32
    %254 = vector.broadcast %cst_103 : f32 to vector<16x32xf32>
    %255 = arith.mulf %253, %254 : vector<16x32xf32>
    %256 = vector.extract_strided_slice %252 {offsets = [0, 32], sizes = [16, 32], strides = [1, 1]} : vector<16x96xf32> to vector<16x32xf32>
    %257 = vector.extract_strided_slice %252 {offsets = [0, 64], sizes = [16, 32], strides = [1, 1]} : vector<16x96xf32> to vector<16x32xf32>
    %c1_104 = arith.constant 1 : index
    %c0_105 = arith.constant 0 : index
    %c0_106 = arith.constant 0 : index
    %258 = vector.load %arg4[%c1_104, %c0_105, %c0_106] : memref<2x32x32xf32, #tpu.memory_space<vmem>>, vector<1x32x32xf32>
    %259 = vector.shape_cast %258 : vector<1x32x32xf32> to vector<32x32xf32>
    %cst_107 = arith.constant 0.000000e+00 : f32
    %260 = vector.broadcast %cst_107 : f32 to vector<16x32xf32>
    %261 = vector.extract_strided_slice %255 {offsets = [0, 0], sizes = [16, 8], strides = [1, 1]} : vector<16x32xf32> to vector<16x8xf32>
    %262 = vector.shape_cast %261 : vector<16x8xf32> to vector<2x8x8xf32>
    %263 = vector.extract_strided_slice %256 {offsets = [0, 0], sizes = [16, 8], strides = [1, 1]} : vector<16x32xf32> to vector<16x8xf32>
    %264 = vector.shape_cast %263 : vector<16x8xf32> to vector<2x8x8xf32>
    %265 = vector.extract_strided_slice %257 {offsets = [0, 0], sizes = [16, 8], strides = [1, 1]} : vector<16x32xf32> to vector<16x8xf32>
    %266 = vector.shape_cast %265 : vector<16x8xf32> to vector<2x8x8xf32>
    "tpu.trace_start"() <{level = 10 : i32, message = "bqd,bkd->bqk"}> : () -> ()
    %cst_108 = arith.constant dense<0.000000e+00> : vector<2x8x8xf32>
    %267 = tpu.matmul %262, %264, %cst_108 {dimension_numbers = #tpu.dot_dimension_numbers<[2], [2], [1], [1], [0, 0, 0, 1, 1, 1], [0], [0]>} : vector<2x8x8xf32>, vector<2x8x8xf32>, vector<2x8x8xf32> -> vector<2x8x8xf32>
    "tpu.trace_stop"() : () -> ()
    %268 = vector.shape_cast %6 : vector<8x8xf32> to vector<1x8x8xf32>
    %269 = vector.broadcast %268 : vector<1x8x8xf32> to vector<2x8x8xf32>
    %270 = arith.addf %267, %269 : vector<2x8x8xf32>
    %cst_109 = arith.constant dense<0xFF800000> : vector<2x8xf32>
    %271 = vector.multi_reduction <maximumf>, %270, %cst_109 [2] : vector<2x8x8xf32> to vector<2x8xf32>
    %272 = vector.shape_cast %271 : vector<2x8xf32> to vector<2x8x1xf32>
    %273 = vector.broadcast %272 : vector<2x8x1xf32> to vector<2x8x8xf32>
    %274 = arith.subf %270, %273 : vector<2x8x8xf32>
    %275 = math.exp %274 : vector<2x8x8xf32>
    %cst_110 = arith.constant dense<0.000000e+00> : vector<2x8xf32>
    %276 = vector.multi_reduction <add>, %275, %cst_110 [2] : vector<2x8x8xf32> to vector<2x8xf32>
    %277 = vector.shape_cast %276 : vector<2x8xf32> to vector<2x8x1xf32>
    %278 = tpu.reciprocal %277 {approx = true} : vector<2x8x1xf32> -> vector<2x8x1xf32>
    %279 = vector.broadcast %278 : vector<2x8x1xf32> to vector<2x8x8xf32>
    %280 = arith.mulf %275, %279 : vector<2x8x8xf32>
    "tpu.trace_start"() <{level = 10 : i32, message = "bqk,bkd->bqd"}> : () -> ()
    %cst_111 = arith.constant dense<0.000000e+00> : vector<2x8x8xf32>
    %281 = tpu.matmul %280, %266, %cst_111 {dimension_numbers = #tpu.dot_dimension_numbers<[2], [1], [1], [2], [0, 0, 0, 1, 1, 2], [0], [0]>} : vector<2x8x8xf32>, vector<2x8x8xf32>, vector<2x8x8xf32> -> vector<2x8x8xf32>
    "tpu.trace_stop"() : () -> ()
    %282 = vector.shape_cast %281 : vector<2x8x8xf32> to vector<16x8xf32>
    %283 = vector.extract_strided_slice %259 {offsets = [0, 0], sizes = [8, 32], strides = [1, 1]} : vector<32x32xf32> to vector<8x32xf32>
    %cst_112 = arith.constant dense<0.000000e+00> : vector<16x32xf32>
    %284 = tpu.matmul %282, %283, %cst_112 {dimension_numbers = #tpu.dot_dimension_numbers<[1], [0], [0], [1], [0, 0, 1, 1], [], []>} : vector<16x8xf32>, vector<8x32xf32>, vector<16x32xf32> -> vector<16x32xf32>
    %285 = arith.addf %260, %284 : vector<16x32xf32>
    %286 = vector.extract_strided_slice %255 {offsets = [0, 8], sizes = [16, 8], strides = [1, 1]} : vector<16x32xf32> to vector<16x8xf32>
    %287 = vector.shape_cast %286 : vector<16x8xf32> to vector<2x8x8xf32>
    %288 = vector.extract_strided_slice %256 {offsets = [0, 8], sizes = [16, 8], strides = [1, 1]} : vector<16x32xf32> to vector<16x8xf32>
    %289 = vector.shape_cast %288 : vector<16x8xf32> to vector<2x8x8xf32>
    %290 = vector.extract_strided_slice %257 {offsets = [0, 8], sizes = [16, 8], strides = [1, 1]} : vector<16x32xf32> to vector<16x8xf32>
    %291 = vector.shape_cast %290 : vector<16x8xf32> to vector<2x8x8xf32>
    "tpu.trace_start"() <{level = 10 : i32, message = "bqd,bkd->bqk"}> : () -> ()
    %cst_113 = arith.constant dense<0.000000e+00> : vector<2x8x8xf32>
    %292 = tpu.matmul %287, %289, %cst_113 {dimension_numbers = #tpu.dot_dimension_numbers<[2], [2], [1], [1], [0, 0, 0, 1, 1, 1], [0], [0]>} : vector<2x8x8xf32>, vector<2x8x8xf32>, vector<2x8x8xf32> -> vector<2x8x8xf32>
    "tpu.trace_stop"() : () -> ()
    %293 = vector.shape_cast %6 : vector<8x8xf32> to vector<1x8x8xf32>
    %294 = vector.broadcast %293 : vector<1x8x8xf32> to vector<2x8x8xf32>
    %295 = arith.addf %292, %294 : vector<2x8x8xf32>
    %cst_114 = arith.constant dense<0xFF800000> : vector<2x8xf32>
    %296 = vector.multi_reduction <maximumf>, %295, %cst_114 [2] : vector<2x8x8xf32> to vector<2x8xf32>
    %297 = vector.shape_cast %296 : vector<2x8xf32> to vector<2x8x1xf32>
    %298 = vector.broadcast %297 : vector<2x8x1xf32> to vector<2x8x8xf32>
    %299 = arith.subf %295, %298 : vector<2x8x8xf32>
    %300 = math.exp %299 : vector<2x8x8xf32>
    %cst_115 = arith.constant dense<0.000000e+00> : vector<2x8xf32>
    %301 = vector.multi_reduction <add>, %300, %cst_115 [2] : vector<2x8x8xf32> to vector<2x8xf32>
    %302 = vector.shape_cast %301 : vector<2x8xf32> to vector<2x8x1xf32>
    %303 = tpu.reciprocal %302 {approx = true} : vector<2x8x1xf32> -> vector<2x8x1xf32>
    %304 = vector.broadcast %303 : vector<2x8x1xf32> to vector<2x8x8xf32>
    %305 = arith.mulf %300, %304 : vector<2x8x8xf32>
    "tpu.trace_start"() <{level = 10 : i32, message = "bqk,bkd->bqd"}> : () -> ()
    %cst_116 = arith.constant dense<0.000000e+00> : vector<2x8x8xf32>
    %306 = tpu.matmul %305, %291, %cst_116 {dimension_numbers = #tpu.dot_dimension_numbers<[2], [1], [1], [2], [0, 0, 0, 1, 1, 2], [0], [0]>} : vector<2x8x8xf32>, vector<2x8x8xf32>, vector<2x8x8xf32> -> vector<2x8x8xf32>
    "tpu.trace_stop"() : () -> ()
    %307 = vector.shape_cast %306 : vector<2x8x8xf32> to vector<16x8xf32>
    %308 = vector.extract_strided_slice %259 {offsets = [8, 0], sizes = [8, 32], strides = [1, 1]} : vector<32x32xf32> to vector<8x32xf32>
    %cst_117 = arith.constant dense<0.000000e+00> : vector<16x32xf32>
    %309 = tpu.matmul %307, %308, %cst_117 {dimension_numbers = #tpu.dot_dimension_numbers<[1], [0], [0], [1], [0, 0, 1, 1], [], []>} : vector<16x8xf32>, vector<8x32xf32>, vector<16x32xf32> -> vector<16x32xf32>
    %310 = arith.addf %285, %309 : vector<16x32xf32>
    %311 = vector.extract_strided_slice %255 {offsets = [0, 16], sizes = [16, 8], strides = [1, 1]} : vector<16x32xf32> to vector<16x8xf32>
    %312 = vector.shape_cast %311 : vector<16x8xf32> to vector<2x8x8xf32>
    %313 = vector.extract_strided_slice %256 {offsets = [0, 16], sizes = [16, 8], strides = [1, 1]} : vector<16x32xf32> to vector<16x8xf32>
    %314 = vector.shape_cast %313 : vector<16x8xf32> to vector<2x8x8xf32>
    %315 = vector.extract_strided_slice %257 {offsets = [0, 16], sizes = [16, 8], strides = [1, 1]} : vector<16x32xf32> to vector<16x8xf32>
    %316 = vector.shape_cast %315 : vector<16x8xf32> to vector<2x8x8xf32>
    "tpu.trace_start"() <{level = 10 : i32, message = "bqd,bkd->bqk"}> : () -> ()
    %cst_118 = arith.constant dense<0.000000e+00> : vector<2x8x8xf32>
    %317 = tpu.matmul %312, %314, %cst_118 {dimension_numbers = #tpu.dot_dimension_numbers<[2], [2], [1], [1], [0, 0, 0, 1, 1, 1], [0], [0]>} : vector<2x8x8xf32>, vector<2x8x8xf32>, vector<2x8x8xf32> -> vector<2x8x8xf32>
    "tpu.trace_stop"() : () -> ()
    %318 = vector.shape_cast %6 : vector<8x8xf32> to vector<1x8x8xf32>
    %319 = vector.broadcast %318 : vector<1x8x8xf32> to vector<2x8x8xf32>
    %320 = arith.addf %317, %319 : vector<2x8x8xf32>
    %cst_119 = arith.constant dense<0xFF800000> : vector<2x8xf32>
    %321 = vector.multi_reduction <maximumf>, %320, %cst_119 [2] : vector<2x8x8xf32> to vector<2x8xf32>
    %322 = vector.shape_cast %321 : vector<2x8xf32> to vector<2x8x1xf32>
    %323 = vector.broadcast %322 : vector<2x8x1xf32> to vector<2x8x8xf32>
    %324 = arith.subf %320, %323 : vector<2x8x8xf32>
    %325 = math.exp %324 : vector<2x8x8xf32>
    %cst_120 = arith.constant dense<0.000000e+00> : vector<2x8xf32>
    %326 = vector.multi_reduction <add>, %325, %cst_120 [2] : vector<2x8x8xf32> to vector<2x8xf32>
    %327 = vector.shape_cast %326 : vector<2x8xf32> to vector<2x8x1xf32>
    %328 = tpu.reciprocal %327 {approx = true} : vector<2x8x1xf32> -> vector<2x8x1xf32>
    %329 = vector.broadcast %328 : vector<2x8x1xf32> to vector<2x8x8xf32>
    %330 = arith.mulf %325, %329 : vector<2x8x8xf32>
    "tpu.trace_start"() <{level = 10 : i32, message = "bqk,bkd->bqd"}> : () -> ()
    %cst_121 = arith.constant dense<0.000000e+00> : vector<2x8x8xf32>
    %331 = tpu.matmul %330, %316, %cst_121 {dimension_numbers = #tpu.dot_dimension_numbers<[2], [1], [1], [2], [0, 0, 0, 1, 1, 2], [0], [0]>} : vector<2x8x8xf32>, vector<2x8x8xf32>, vector<2x8x8xf32> -> vector<2x8x8xf32>
    "tpu.trace_stop"() : () -> ()
    %332 = vector.shape_cast %331 : vector<2x8x8xf32> to vector<16x8xf32>
    %333 = vector.extract_strided_slice %259 {offsets = [16, 0], sizes = [8, 32], strides = [1, 1]} : vector<32x32xf32> to vector<8x32xf32>
    %cst_122 = arith.constant dense<0.000000e+00> : vector<16x32xf32>
    %334 = tpu.matmul %332, %333, %cst_122 {dimension_numbers = #tpu.dot_dimension_numbers<[1], [0], [0], [1], [0, 0, 1, 1], [], []>} : vector<16x8xf32>, vector<8x32xf32>, vector<16x32xf32> -> vector<16x32xf32>
    %335 = arith.addf %310, %334 : vector<16x32xf32>
    %336 = vector.extract_strided_slice %255 {offsets = [0, 24], sizes = [16, 8], strides = [1, 1]} : vector<16x32xf32> to vector<16x8xf32>
    %337 = vector.shape_cast %336 : vector<16x8xf32> to vector<2x8x8xf32>
    %338 = vector.extract_strided_slice %256 {offsets = [0, 24], sizes = [16, 8], strides = [1, 1]} : vector<16x32xf32> to vector<16x8xf32>
    %339 = vector.shape_cast %338 : vector<16x8xf32> to vector<2x8x8xf32>
    %340 = vector.extract_strided_slice %257 {offsets = [0, 24], sizes = [16, 8], strides = [1, 1]} : vector<16x32xf32> to vector<16x8xf32>
    %341 = vector.shape_cast %340 : vector<16x8xf32> to vector<2x8x8xf32>
    "tpu.trace_start"() <{level = 10 : i32, message = "bqd,bkd->bqk"}> : () -> ()
    %cst_123 = arith.constant dense<0.000000e+00> : vector<2x8x8xf32>
    %342 = tpu.matmul %337, %339, %cst_123 {dimension_numbers = #tpu.dot_dimension_numbers<[2], [2], [1], [1], [0, 0, 0, 1, 1, 1], [0], [0]>} : vector<2x8x8xf32>, vector<2x8x8xf32>, vector<2x8x8xf32> -> vector<2x8x8xf32>
    "tpu.trace_stop"() : () -> ()
    %343 = vector.shape_cast %6 : vector<8x8xf32> to vector<1x8x8xf32>
    %344 = vector.broadcast %343 : vector<1x8x8xf32> to vector<2x8x8xf32>
    %345 = arith.addf %342, %344 : vector<2x8x8xf32>
    %cst_124 = arith.constant dense<0xFF800000> : vector<2x8xf32>
    %346 = vector.multi_reduction <maximumf>, %345, %cst_124 [2] : vector<2x8x8xf32> to vector<2x8xf32>
    %347 = vector.shape_cast %346 : vector<2x8xf32> to vector<2x8x1xf32>
    %348 = vector.broadcast %347 : vector<2x8x1xf32> to vector<2x8x8xf32>
    %349 = arith.subf %345, %348 : vector<2x8x8xf32>
    %350 = math.exp %349 : vector<2x8x8xf32>
    %cst_125 = arith.constant dense<0.000000e+00> : vector<2x8xf32>
    %351 = vector.multi_reduction <add>, %350, %cst_125 [2] : vector<2x8x8xf32> to vector<2x8xf32>
    %352 = vector.shape_cast %351 : vector<2x8xf32> to vector<2x8x1xf32>
    %353 = tpu.reciprocal %352 {approx = true} : vector<2x8x1xf32> -> vector<2x8x1xf32>
    %354 = vector.broadcast %353 : vector<2x8x1xf32> to vector<2x8x8xf32>
    %355 = arith.mulf %350, %354 : vector<2x8x8xf32>
    "tpu.trace_start"() <{level = 10 : i32, message = "bqk,bkd->bqd"}> : () -> ()
    %cst_126 = arith.constant dense<0.000000e+00> : vector<2x8x8xf32>
    %356 = tpu.matmul %355, %341, %cst_126 {dimension_numbers = #tpu.dot_dimension_numbers<[2], [1], [1], [2], [0, 0, 0, 1, 1, 2], [0], [0]>} : vector<2x8x8xf32>, vector<2x8x8xf32>, vector<2x8x8xf32> -> vector<2x8x8xf32>
    "tpu.trace_stop"() : () -> ()
    %357 = vector.shape_cast %356 : vector<2x8x8xf32> to vector<16x8xf32>
    %358 = vector.extract_strided_slice %259 {offsets = [24, 0], sizes = [8, 32], strides = [1, 1]} : vector<32x32xf32> to vector<8x32xf32>
    %cst_127 = arith.constant dense<0.000000e+00> : vector<16x32xf32>
    %359 = tpu.matmul %357, %358, %cst_127 {dimension_numbers = #tpu.dot_dimension_numbers<[1], [0], [0], [1], [0, 0, 1, 1], [], []>} : vector<16x8xf32>, vector<8x32xf32>, vector<16x32xf32> -> vector<16x32xf32>
    %360 = arith.addf %335, %359 : vector<16x32xf32>
    %361 = arith.addf %206, %360 : vector<16x32xf32>
    %362 = vector.broadcast %212 : vector<1x32xf32> to vector<16x32xf32>
    %363 = arith.addf %361, %362 : vector<16x32xf32>
    %cst_128 = arith.constant dense<0.000000e+00> : vector<16xf32>
    %364 = vector.multi_reduction <add>, %363, %cst_128 [1] : vector<16x32xf32> to vector<16xf32>
    %365 = vector.shape_cast %364 : vector<16xf32> to vector<16x1xf32>
    %cst_129 = arith.constant 3.200000e+01 : f32
    %366 = vector.broadcast %cst_129 : f32 to vector<16x1xf32>
    %367 = arith.divf %365, %366 : vector<16x1xf32>
    %368 = vector.broadcast %367 : vector<16x1xf32> to vector<16x32xf32>
    %369 = arith.subf %363, %368 : vector<16x32xf32>
    %370 = vector.broadcast %367 : vector<16x1xf32> to vector<16x32xf32>
    %371 = arith.subf %363, %370 : vector<16x32xf32>
    %372 = arith.mulf %369, %371 : vector<16x32xf32>
    %cst_130 = arith.constant dense<0.000000e+00> : vector<16xf32>
    %373 = vector.multi_reduction <add>, %372, %cst_130 [1] : vector<16x32xf32> to vector<16xf32>
    %374 = vector.shape_cast %373 : vector<16xf32> to vector<16x1xf32>
    %cst_131 = arith.constant 3.200000e+01 : f32
    %375 = vector.broadcast %cst_131 : f32 to vector<16x1xf32>
    %376 = arith.divf %374, %375 : vector<16x1xf32>
    %377 = vector.broadcast %367 : vector<16x1xf32> to vector<16x32xf32>
    %378 = arith.subf %363, %377 : vector<16x32xf32>
    %cst_132 = arith.constant 9.99999974E-6 : f32
    %379 = vector.broadcast %cst_132 : f32 to vector<16x1xf32>
    %380 = arith.addf %376, %379 : vector<16x1xf32>
    %381 = math.rsqrt %380 : vector<16x1xf32>
    %382 = vector.broadcast %381 : vector<16x1xf32> to vector<16x32xf32>
    %383 = arith.mulf %378, %382 : vector<16x32xf32>
    %384 = vector.broadcast %214 : vector<1x32xf32> to vector<16x32xf32>
    %385 = arith.mulf %383, %384 : vector<16x32xf32>
    %386 = vector.broadcast %216 : vector<1x32xf32> to vector<16x32xf32>
    %387 = arith.addf %385, %386 : vector<16x32xf32>
    %c1_133 = arith.constant 1 : index
    %c0_134 = arith.constant 0 : index
    %c0_135 = arith.constant 0 : index
    %388 = vector.load %arg5[%c1_133, %c0_134, %c0_135] : memref<2x32x128xf32, #tpu.memory_space<vmem>>, vector<1x32x128xf32>
    %389 = vector.shape_cast %388 : vector<1x32x128xf32> to vector<32x128xf32>
    %cst_136 = arith.constant dense<0.000000e+00> : vector<16x128xf32>
    %390 = tpu.matmul %387, %389, %cst_136 {dimension_numbers = #tpu.dot_dimension_numbers<[1], [0], [0], [1], [0, 0, 1, 1], [], []>} : vector<16x32xf32>, vector<32x128xf32>, vector<16x128xf32> -> vector<16x128xf32>
    %391 = vector.broadcast %223 : vector<1x128xf32> to vector<16x128xf32>
    %392 = arith.addf %390, %391 : vector<16x128xf32>
    %cst_137 = arith.constant 1.702000e+00 : f32
    %393 = vector.broadcast %cst_137 : f32 to vector<16x128xf32>
    %394 = arith.mulf %393, %392 : vector<16x128xf32>
    %395 = arith.negf %394 : vector<16x128xf32>
    %396 = math.exp %395 : vector<16x128xf32>
    %cst_138 = arith.constant 1.000000e+00 : f32
    %397 = vector.broadcast %cst_138 : f32 to vector<16x128xf32>
    %398 = arith.addf %397, %396 : vector<16x128xf32>
    %399 = arith.divf %397, %398 : vector<16x128xf32>
    %400 = arith.mulf %392, %399 : vector<16x128xf32>
    %c1_139 = arith.constant 1 : index
    %c0_140 = arith.constant 0 : index
    %c0_141 = arith.constant 0 : index
    %401 = vector.load %arg6[%c1_139, %c0_140, %c0_141] : memref<2x128x32xf32, #tpu.memory_space<vmem>>, vector<1x128x32xf32>
    %402 = vector.shape_cast %401 : vector<1x128x32xf32> to vector<128x32xf32>
    %cst_142 = arith.constant dense<0.000000e+00> : vector<16x32xf32>
    %403 = tpu.matmul %400, %402, %cst_142 {dimension_numbers = #tpu.dot_dimension_numbers<[1], [0], [0], [1], [0, 0, 1, 1], [], []>} : vector<16x128xf32>, vector<128x32xf32>, vector<16x32xf32> -> vector<16x32xf32>
    %404 = vector.broadcast %218 : vector<1x32xf32> to vector<16x32xf32>
    %405 = arith.addf %403, %404 : vector<16x32xf32>
    %406 = arith.addf %363, %405 : vector<16x32xf32>
    %407 = tpu.iota {dimensions = array<i32: 1>} : vector<1x16xi32>
    %c0_143 = arith.constant 0 : index
    %408 = memref.load %arg1[%c0_143] : memref<2xi32, #tpu.memory_space<smem>>
    %c0_i32 = arith.constant 0 : i32
    %409 = arith.addi %c0_i32, %408 : i32
    %410 = vector.broadcast %409 : i32 to vector<1x16xi32>
    %411 = arith.cmpi eq, %407, %410 : vector<1x16xi32>
    %412 = arith.extui %411 : vector<1x16xi1> to vector<1x16xi32>
    %413 = arith.sitofp %412 : vector<1x16xi32> to vector<1x16xf32>
    %c1_144 = arith.constant 1 : index
    %414 = memref.load %arg1[%c1_144] : memref<2xi32, #tpu.memory_space<smem>>
    %c8_i32 = arith.constant 8 : i32
    %415 = arith.addi %c8_i32, %414 : i32
    %416 = vector.broadcast %415 : i32 to vector<1x16xi32>
    %417 = arith.cmpi eq, %407, %416 : vector<1x16xi32>
    %418 = arith.extui %417 : vector<1x16xi1> to vector<1x16xi32>
    %419 = arith.sitofp %418 : vector<1x16xi32> to vector<1x16xf32>
    %420 = tpu.concatenate %413, %419 in 0 : vector<1x16xf32>, vector<1x16xf32> -> vector<2x16xf32>
    %cst_145 = arith.constant dense<0.000000e+00> : vector<2x32xf32>
    %421 = tpu.matmul %420, %406, %cst_145 {dimension_numbers = #tpu.dot_dimension_numbers<[1], [0], [0], [1], [0, 0, 1, 1], [], []>} : vector<2x16xf32>, vector<16x32xf32>, vector<2x32xf32> -> vector<2x32xf32>
    %c0_146 = arith.constant 0 : index
    %c0_147 = arith.constant 0 : index
    %422 = vector.load %arg9[%c0_146, %c0_147] : memref<2x32xf32, #tpu.memory_space<vmem>>, vector<1x32xf32>
    %c1_148 = arith.constant 1 : index
    %c0_149 = arith.constant 0 : index
    %423 = vector.load %arg9[%c1_148, %c0_149] : memref<2x32xf32, #tpu.memory_space<vmem>>, vector<1x32xf32>
    %cst_150 = arith.constant dense<0.000000e+00> : vector<2xf32>
    %424 = vector.multi_reduction <add>, %421, %cst_150 [1] : vector<2x32xf32> to vector<2xf32>
    %425 = vector.shape_cast %424 : vector<2xf32> to vector<2x1xf32>
    %cst_151 = arith.constant 3.200000e+01 : f32
    %426 = vector.broadcast %cst_151 : f32 to vector<2x1xf32>
    %427 = arith.divf %425, %426 : vector<2x1xf32>
    %428 = vector.broadcast %427 : vector<2x1xf32> to vector<2x32xf32>
    %429 = arith.subf %421, %428 : vector<2x32xf32>
    %430 = vector.broadcast %427 : vector<2x1xf32> to vector<2x32xf32>
    %431 = arith.subf %421, %430 : vector<2x32xf32>
    %432 = arith.mulf %429, %431 : vector<2x32xf32>
    %cst_152 = arith.constant dense<0.000000e+00> : vector<2xf32>
    %433 = vector.multi_reduction <add>, %432, %cst_152 [1] : vector<2x32xf32> to vector<2xf32>
    %434 = vector.shape_cast %433 : vector<2xf32> to vector<2x1xf32>
    %cst_153 = arith.constant 3.200000e+01 : f32
    %435 = vector.broadcast %cst_153 : f32 to vector<2x1xf32>
    %436 = arith.divf %434, %435 : vector<2x1xf32>
    %437 = vector.broadcast %427 : vector<2x1xf32> to vector<2x32xf32>
    %438 = arith.subf %421, %437 : vector<2x32xf32>
    %cst_154 = arith.constant 9.99999974E-6 : f32
    %439 = vector.broadcast %cst_154 : f32 to vector<2x1xf32>
    %440 = arith.addf %436, %439 : vector<2x1xf32>
    %441 = math.rsqrt %440 : vector<2x1xf32>
    %442 = vector.broadcast %441 : vector<2x1xf32> to vector<2x32xf32>
    %443 = arith.mulf %438, %442 : vector<2x32xf32>
    %444 = vector.broadcast %422 : vector<1x32xf32> to vector<2x32xf32>
    %445 = arith.mulf %443, %444 : vector<2x32xf32>
    %446 = vector.broadcast %423 : vector<1x32xf32> to vector<2x32xf32>
    %447 = arith.addf %445, %446 : vector<2x32xf32>
    %c0_155 = arith.constant 0 : index
    %c0_156 = arith.constant 0 : index
    %448 = vector.load %arg10[%c0_155, %c0_156] : memref<32x16xf32, #tpu.memory_space<vmem>>, vector<32x16xf32>
    %cst_157 = arith.constant dense<0.000000e+00> : vector<2x16xf32>
    %449 = tpu.matmul %447, %448, %cst_157 {dimension_numbers = #tpu.dot_dimension_numbers<[1], [0], [0], [1], [0, 0, 1, 1], [], []>} : vector<2x32xf32>, vector<32x16xf32>, vector<2x16xf32> -> vector<2x16xf32>
    %c0_158 = arith.constant 0 : index
    %c0_159 = arith.constant 0 : index
    %450 = vector.load %arg11[%c0_158, %c0_159] : memref<2x16xf32, #tpu.memory_space<vmem>>, vector<2x16xf32>
    tpu.vector_store %arg11[%c0_158, %c0_159], %449 {strides = array<i32>} : memref<2x16xf32, #tpu.memory_space<vmem>>, vector<2x16xf32>,
    return
  }
  func.func @transform_0(%arg0: i32, %arg1: memref<2xi32, #tpu.memory_space<smem>>) -> (i32, i32) {
    %c0_i32 = arith.constant 0 : i32
    %c0_i32_0 = arith.constant 0 : i32
    %c0_i32_1 = arith.constant 0 : i32
    return %c0_i32, %c0_i32_0 : i32, i32
  }
  func.func @transform_1(%arg0: i32, %arg1: memref<2xi32, #tpu.memory_space<smem>>) -> (i32, i32, i32) {
    %c0_i32 = arith.constant 0 : i32
    %c0_i32_0 = arith.constant 0 : i32
    %c0_i32_1 = arith.constant 0 : i32
    %c0_i32_2 = arith.constant 0 : i32
    return %c0_i32, %c0_i32_0, %c0_i32_1 : i32, i32, i32
  }
  func.func @transform_2(%arg0: i32, %arg1: memref<2xi32, #tpu.memory_space<smem>>) -> (i32, i32, i32) {
    %c0_i32 = arith.constant 0 : i32
    %c0_i32_0 = arith.constant 0 : i32
    %c0_i32_1 = arith.constant 0 : i32
    %c0_i32_2 = arith.constant 0 : i32
    return %c0_i32, %c0_i32_0, %c0_i32_1 : i32, i32, i32
  }
  func.func @transform_3(%arg0: i32, %arg1: memref<2xi32, #tpu.memory_space<smem>>) -> (i32, i32, i32) {
    %c0_i32 = arith.constant 0 : i32
    %c0_i32_0 = arith.constant 0 : i32
    %c0_i32_1 = arith.constant 0 : i32
    %c0_i32_2 = arith.constant 0 : i32
    return %c0_i32, %c0_i32_0, %c0_i32_1 : i32, i32, i32
  }
  func.func @transform_4(%arg0: i32, %arg1: memref<2xi32, #tpu.memory_space<smem>>) -> (i32, i32, i32) {
    %c0_i32 = arith.constant 0 : i32
    %c0_i32_0 = arith.constant 0 : i32
    %c0_i32_1 = arith.constant 0 : i32
    %c0_i32_2 = arith.constant 0 : i32
    return %c0_i32, %c0_i32_0, %c0_i32_1 : i32, i32, i32
  }
  func.func @transform_5(%arg0: i32, %arg1: memref<2xi32, #tpu.memory_space<smem>>) -> (i32, i32, i32) {
    %c0_i32 = arith.constant 0 : i32
    %c0_i32_0 = arith.constant 0 : i32
    %c0_i32_1 = arith.constant 0 : i32
    %c0_i32_2 = arith.constant 0 : i32
    return %c0_i32, %c0_i32_0, %c0_i32_1 : i32, i32, i32
  }
  func.func @transform_6(%arg0: i32, %arg1: memref<2xi32, #tpu.memory_space<smem>>) -> (i32, i32, i32) {
    %c0_i32 = arith.constant 0 : i32
    %c0_i32_0 = arith.constant 0 : i32
    %c0_i32_1 = arith.constant 0 : i32
    %c0_i32_2 = arith.constant 0 : i32
    return %c0_i32, %c0_i32_0, %c0_i32_1 : i32, i32, i32
  }
  func.func @transform_7(%arg0: i32, %arg1: memref<2xi32, #tpu.memory_space<smem>>) -> (i32, i32) {
    %c0_i32 = arith.constant 0 : i32
    %c0_i32_0 = arith.constant 0 : i32
    %c0_i32_1 = arith.constant 0 : i32
    return %c0_i32, %c0_i32_0 : i32, i32
  }
  func.func @transform_8(%arg0: i32, %arg1: memref<2xi32, #tpu.memory_space<smem>>) -> (i32, i32) {
    %c0_i32 = arith.constant 0 : i32
    %c0_i32_0 = arith.constant 0 : i32
    %c0_i32_1 = arith.constant 0 : i32
    return %c0_i32, %c0_i32_0 : i32, i32
  }
  func.func @transform_9(%arg0: i32, %arg1: memref<2xi32, #tpu.memory_space<smem>>) -> (i32, i32) {
    %c0_i32 = arith.constant 0 : i32
    %c0_i32_0 = arith.constant 0 : i32
    %c0_i32_1 = arith.constant 0 : i32
    return %c0_i32, %c0_i32_0 : i32, i32
  }
}

</mosaic_0001>

<llo_original>
// kernel: tpu_custom_call.1
$region0: #{tpu_custom_call.1}
  #allocation0 [shape = 'u32[]', space=smem, size = 0x4, offset = 0x4, fixed_abs, tag = 'smem constant byte address 0x4 - core index']
  #allocation1 [shape = 'u32[72,128]{1,0:T(1,128)}', space=vmem, size = 0x9000, scoped, tag = 'internal scratch']
  #allocation2 [shape = 's32[1]{0}', space=sflag, size = 0x4, scoped, tag = 'scoped memory for tpu_custom_call.1']
  #allocation3 [shape = 'u8[512]{0}', space=smem, size = 0x200, scoped, tag = 'prefetched SMEM operand 0']
  %s0 = inlined_call_operand.vmem [shape: s32[2], index: 0, kind: input, shape index: {}]
  %s1 = inlined_call_operand.vmem [shape: f32[16,32], index: 1, kind: input, shape index: {}]
  %s2 = inlined_call_operand.vmem [shape: f32[2,32,96], index: 2, kind: input, shape index: {}]
  %s3 = inlined_call_operand.vmem [shape: f32[2,32,32], index: 3, kind: input, shape index: {}]
  %s4 = inlined_call_operand.vmem [shape: f32[2,32,128], index: 4, kind: input, shape index: {}]
  %s5 = inlined_call_operand.vmem [shape: f32[2,128,32], index: 5, kind: input, shape index: {}]
  %s6 = inlined_call_operand.vmem [shape: f32[2,8,32], index: 6, kind: input, shape index: {}]
  %s7 = inlined_call_operand.vmem [shape: f32[2,2,128], index: 7, kind: input, shape index: {}]
  %s8 = inlined_call_operand.vmem [shape: f32[2,32], index: 8, kind: input, shape index: {}]
  %s9 = inlined_call_operand.vmem [shape: f32[32,16], index: 9, kind: input, shape index: {}]
  %s10 = inlined_call_operand.hbm [shape: f32[2,16], index: 10, kind: output, shape index: {}]
  %s11 = sld [smem:[#allocation0]]
  $region46: #{tpu_custom_call.1} parent=0
    _
  %s13 = ssub.s32 1, %s11
  %s14 = scalar_select 0, %s13, %s11
  %s16 = sshll.u32 %s0, 4
  %s17 = int_to_ptr.vmem [resolvable:$true] %s16
  %19 = dma.vmem_to_smem %s17, 16, [#allocation3], [#allocation2]
  %21 = dma.done [#allocation2], 16
  %22 = sfence
  $region1: #{tpu_custom_call.1} parent=0
    #allocation4 [shape = 'u8[1024]{0}', space=vmem, size = 0x400, scoped, tag = 'output window, operand 0, single buffered']
    #allocation5 [shape = 's32[1]{0}', space=sflag, size = 0x4, scoped, tag = 'scoped memory for tpu_custom_call.1']
    %23 = vsyncpa [#allocation5], 0
    // Predicated region
    $region2: #{tpu_custom_call.1} parent=1 // pred_check
      _
    $region3: #{tpu_custom_call.1} parent=1 // pred_check_branch
      %25 = sbr.rel (0) target = $region5
    $region4: #{tpu_custom_call.1} parent=1 // pred_region
      _
    $region5: #{tpu_custom_call.1} parent=1 // pred_fallthru
      _
    // Predicated region
    $region6: #{tpu_custom_call.1} parent=1 // pred_check
      _
    $region7: #{tpu_custom_call.1} parent=1 // pred_check_branch
      %27 = sbr.rel (0) target = $region9
    $region8: #{tpu_custom_call.1} parent=1 // pred_region
      _
    $region9: #{tpu_custom_call.1} parent=1 // pred_fallthru
      _
    // Predicated region
    $region10: #{tpu_custom_call.1} parent=1 // pred_check
      _
    $region11: #{tpu_custom_call.1} parent=1 // pred_check_branch
      %29 = sbr.rel (0) target = $region13
    $region12: #{tpu_custom_call.1} parent=1 // pred_region
      _
    $region13: #{tpu_custom_call.1} parent=1 // pred_fallthru
      _
    // Predicated region
    $region14: #{tpu_custom_call.1} parent=1 // pred_check
      _
    $region15: #{tpu_custom_call.1} parent=1 // pred_check_branch
      %31 = sbr.rel (0) target = $region17
    $region16: #{tpu_custom_call.1} parent=1 // pred_region
      _
    $region17: #{tpu_custom_call.1} parent=1 // pred_fallthru
      _
    // Predicated region
    $region18: #{tpu_custom_call.1} parent=1 // pred_check
      _
    $region19: #{tpu_custom_call.1} parent=1 // pred_check_branch
      %33 = sbr.rel (0) target = $region21
    $region20: #{tpu_custom_call.1} parent=1 // pred_region
      _
    $region21: #{tpu_custom_call.1} parent=1 // pred_fallthru
      _
    // Predicated region
    $region22: #{tpu_custom_call.1} parent=1 // pred_check
      _
    $region23: #{tpu_custom_call.1} parent=1 // pred_check_branch
      %35 = sbr.rel (0) target = $region25
    $region24: #{tpu_custom_call.1} parent=1 // pred_region
      _
    $region25: #{tpu_custom_call.1} parent=1 // pred_fallthru
      _
    // Predicated region
    $region26: #{tpu_custom_call.1} parent=1 // pred_check
      _
    $region27: #{tpu_custom_call.1} parent=1 // pred_check_branch
      %37 = sbr.rel (0) target = $region29
    $region28: #{tpu_custom_call.1} parent=1 // pred_region
      _
    $region29: #{tpu_custom_call.1} parent=1 // pred_fallthru
      _
    // Predicated region
    $region30: #{tpu_custom_call.1} parent=1 // pred_check
      _
    $region31: #{tpu_custom_call.1} parent=1 // pred_check_branch
      %39 = sbr.rel (0) target = $region33
    $region32: #{tpu_custom_call.1} parent=1 // pred_region
      _
    $region33: #{tpu_custom_call.1} parent=1 // pred_fallthru
      _
    // Predicated region
    $region34: #{tpu_custom_call.1} parent=1 // pred_check
      _
    $region35: #{tpu_custom_call.1} parent=1 // pred_check_branch
      %41 = sbr.rel (0) target = $region37
    $region36: #{tpu_custom_call.1} parent=1 // pred_region
      _
    $region37: #{tpu_custom_call.1} parent=1 // pred_fallthru
      _
    %v42 = vld [vmem:[%s1] sm:$0xff]
    %v43 = vld [vmem:[%s1 + $0x8] sm:$0xff]
    %v44 = vlaneseq
    %v45 = vshrl.u32 %v44, 7
    %v46 = vlaneseq
    %v47 = vand.u32 %v46, 127
    %vm48 = vcmp.gt.s32.totalorder %v47, %v45
    %v49 = vsel %vm48, -1e+30, 0.0
    %v50 = vld [vmem:[%s6] sm:$0x1]
    %v51 = vld [vmem:[%s6 + $0x1] sm:$0x1]
    %v52 = vld [vmem:[%s6 + $0x2] sm:$0x1]
    %v53 = vld [vmem:[%s6 + $0x3] sm:$0x1]
    %v54 = vld [vmem:[%s6 + $0x4] sm:$0x1]
    %v55 = vld [vmem:[%s6 + $0x5] sm:$0x1]
    %v56 = vld [vmem:[%s7] sm:$0x1]
    %v57 = vld [vmem:[%s7 + $0x1] sm:$0x1]
    %vm58 = vcmask 261120
    %v59 = vsel %vm58, %v42, 0.0
    %60 = vadd.xlane.f32.xlu0 %v59
    %v61 = vpop.xlane.xlu0 %60
    %v62 = vsel %vm58, %v43, 0.0
    %63 = vadd.xlane.f32.xlu0 %v62
    %v64 = vpop.xlane.xlu0 %63
    %v65 = vrcp.pop 32.0
    %v66 = vmul.f32 32.0, %v65
    %v67 = vsub.f32 1.0, %v66
    %v68 = vmul.f32 %v65, %v67
    %v69 = vadd.f32 %v65, %v68
    %vm70 = vweird.f32 %v65
    %v71 = vsel %vm70, %v65, %v69
    %v72 = vmul.f32 %v61, %v71
    %v73 = vmul.f32 %v64, %v71
    %v74 = vsub.f32 %v42, %v72
    %v75 = vsub.f32 %v43, %v73
    %v76 = vmul.f32 %v74, %v74
    %v77 = vmul.f32 %v75, %v75
    %v78 = vsel %vm58, %v76, 0.0
    %79 = vadd.xlane.f32.xlu0 %v78
    %v80 = vpop.xlane.xlu0 %79
    %v81 = vsel %vm58, %v77, 0.0
    %82 = vadd.xlane.f32.xlu0 %v81
    %v83 = vpop.xlane.xlu0 %82
    %v84 = vmul.f32 %v80, %v71
    %v85 = vmul.f32 %v83, %v71
    %v86 = vadd.f32 %v84, 1e-05
    %v87 = vadd.f32 %v85, 1e-05
    %v88 = vrsqrt.pop %v86
    %v89 = vmul.f32 %v88, %v86
    %v90 = vmul.f32 %v89, %v88
    %v91 = vmul.f32 0.5, %v90
    %v92 = vsub.f32 1.5, %v91
    %v93 = vmul.f32 %v88, %v92
    %vm94 = vweird.f32 %v86
    %vm95 = vweird.f32 %v88
    %vm96 = vmor %vm94, %vm95
    %v97 = vsel %vm96, %v88, %v93
    %v98 = vrsqrt.pop %v87
    %v99 = vmul.f32 %v98, %v87
    %v100 = vmul.f32 %v99, %v98
    %v101 = vmul.f32 0.5, %v100
    %v102 = vsub.f32 1.5, %v101
    %v103 = vmul.f32 %v98, %v102
    %vm104 = vweird.f32 %v87
    %vm105 = vweird.f32 %v98
    %vm106 = vmor %vm104, %vm105
    %v107 = vsel %vm106, %v98, %v103
    %v108 = vmul.f32 %v74, %v97
    %v109 = vmul.f32 %v75, %v107
    %v110 = vperm.slane %v50, 0
    %v111 = vmul.f32 %v108, %v110
    %v112 = vmul.f32 %v109, %v110
    %v113 = vperm.slane %v51, 0
    %v114 = vadd.f32 %v111, %v113
    %v115 = vadd.f32 %v112, %v113
    %v116 = vld [vmem:[%s2] sm:$0xff]
    %v117 = vld [vmem:[%s2 + $0x8] sm:$0xff]
    %v118 = vld [vmem:[%s2 + $0x10] sm:$0xff]
    %v119 = vld [vmem:[%s2 + $0x18] sm:$0xff]
    %v120 = vperm.slane %v56, 0
    %v122 = vsel %vm58, %v114, 0
    %v125 = vsel %vm58, %v115, 0
    %127 = vmatpush.msra.mxu0 0.0
    %128 = vmatpush.msra.mxu0 0.0
    %129 = vmatpush.msra.mxu0 0.0
    %130 = vmatpush.msra.mxu0 0.0
    %131 = vmatpush.msra.mxu0 0.0
    %132 = vmatpush.msra.mxu0 0.0
    %133 = vmatpush.msra.mxu0 0.0
    %134 = vmatpush.msra.mxu0 0.0
    %135 = vmatpush.msra.mxu0 0.0
    %136 = vmatpush.msra.mxu0 0.0
    %137 = vmatpush.msra.mxu0 0.0
    %138 = vmatpush.msra.mxu0 0.0
    %139 = vmatpush.msra.mxu0 %v119
    %140 = vmatpush.msra.mxu0 %v118
    %141 = vmatpush.msra.mxu0 %v117
    %142 = vmatpush.msra.mxu0 %v116
    %143 = vmatmul.f32.gmra.mxu0 %v122
    %v144 = vpop.f32.mrf.mxu0
    %v145 = vadd.f32 %v120, %v144
    %146 = vmatmul.f32.gmra.mxu0 %v125
    %v147 = vpop.f32.mrf.mxu0
    %v148 = vadd.f32 %v120, %v147
    %149 = vdwg.mxu0
    %v150 = vmul.f32 %v145, 0.35355338
    %v151 = vmul.f32 %v148, 0.35355338
    %v152 = vld [vmem:[%s3] sm:$0xff]
    %v153 = vld [vmem:[%s3 + $0x8] sm:$0xff]
    %v154 = vld [vmem:[%s3 + $0x10] sm:$0xff]
    %v155 = vld [vmem:[%s3 + $0x18] sm:$0xff]
    %157 = vrot.lane.b32.xlu0 %v145, 96
    %v158 = vpop.permute.xlu0 %157
    %vm159 = vcmask 64512
    %v161 = vsel %vm159, %v150, 0
    %v163 = vsel %vm159, %v158, 0
    %165 = vmatpush.xpose.msra.mxu0 0.0
    %166 = vmatpush.xpose.msra.mxu0 0.0
    %167 = vmatpush.xpose.msra.mxu0 0.0
    %168 = vmatpush.xpose.msra.mxu0 0.0
    %169 = vmatpush.xpose.msra.mxu0 0.0
    %170 = vmatpush.xpose.msra.mxu0 0.0
    %171 = vmatpush.xpose.msra.mxu0 0.0
    %172 = vmatpush.xpose.msra.mxu0 0.0
    %173 = vmatpush.xpose.msra.mxu0 0.0
    %174 = vmatpush.xpose.msra.mxu0 0.0
    %175 = vmatpush.xpose.msra.mxu0 0.0
    %176 = vmatpush.xpose.msra.mxu0 0.0
    %177 = vmatpush.xpose.msra.mxu0 0.0
    %178 = vmatpush.xpose.msra.mxu0 0.0
    %179 = vmatpush.xpose.msra.mxu0 0.0
    %180 = vmatpush.xpose.msra.mxu0 %v163
    %181 = vmatmul.f32.gmra.mxu0 %v161
    %v182 = vpop.f32.mrf.mxu0
    %v183 = vadd.f32 %v49, %v182
    %184 = vdwg.mxu0
    %186 = vrot.lane.b32.xlu0 %v148, 96
    %v187 = vpop.permute.xlu0 %186
    %v189 = vsel %vm159, %v151, 0
    %v191 = vsel %vm159, %v187, 0
    %193 = vmatpush.xpose.msra.mxu0 0.0
    %194 = vmatpush.xpose.msra.mxu0 0.0
    %195 = vmatpush.xpose.msra.mxu0 0.0
    %196 = vmatpush.xpose.msra.mxu0 0.0
    %197 = vmatpush.xpose.msra.mxu0 0.0
    %198 = vmatpush.xpose.msra.mxu0 0.0
    %199 = vmatpush.xpose.msra.mxu0 0.0
    %200 = vmatpush.xpose.msra.mxu0 0.0
    %201 = vmatpush.xpose.msra.mxu0 0.0
    %202 = vmatpush.xpose.msra.mxu0 0.0
    %203 = vmatpush.xpose.msra.mxu0 0.0
    %204 = vmatpush.xpose.msra.mxu0 0.0
    %205 = vmatpush.xpose.msra.mxu0 0.0
    %206 = vmatpush.xpose.msra.mxu0 0.0
    %207 = vmatpush.xpose.msra.mxu0 0.0
    %208 = vmatpush.xpose.msra.mxu0 %v191
    %209 = vmatmul.f32.gmra.mxu0 %v189
    %v210 = vpop.f32.mrf.mxu0
    %v211 = vadd.f32 %v49, %v210
    %212 = vdwg.mxu0
    %v213 = vsel %vm159, %v183, -inf
    %214 = vmax.xlane.f32.xlu0 %v213
    %v215 = vpop.xlane.xlu0 %214
    %v216 = vsel %vm159, %v211, -inf
    %217 = vmax.xlane.f32.xlu0 %v216
    %v218 = vpop.xlane.xlu0 %217
    %v219 = vsub.f32 %v183, %v215
    %v220 = vsub.f32 %v211, %v218
    %v221 = vmul.f32 %v219, 1.442695
    %v222 = vpow.pop %v221
    %v223 = vmul.f32 %v220, 1.442695
    %v224 = vpow.pop %v223
    %v225 = vsel %vm159, %v222, 0.0
    %226 = vadd.xlane.f32.xlu0 %v225
    %v227 = vpop.xlane.xlu0 %226
    %v228 = vsel %vm159, %v224, 0.0
    %229 = vadd.xlane.f32.xlu0 %v228
    %v230 = vpop.xlane.xlu0 %229
    %v231 = vrcp.pop %v227
    %v232 = vrcp.pop %v230
    %v233 = vmul.f32 %v222, %v231
    %v234 = vmul.f32 %v224, %v232
    %235 = vrot.lane.b32.xlu0 %v145, 64
    %v236 = vpop.permute.xlu0 %235
    %v239 = vsel %vm159, %v233, 0
    %241 = vmatpush.msra.mxu0 0.0
    %242 = vmatpush.msra.mxu0 0.0
    %243 = vmatpush.msra.mxu0 0.0
    %244 = vmatpush.msra.mxu0 0.0
    %245 = vmatpush.msra.mxu0 0.0
    %246 = vmatpush.msra.mxu0 0.0
    %247 = vmatpush.msra.mxu0 0.0
    %248 = vmatpush.msra.mxu0 0.0
    %249 = vmatpush.msra.mxu0 0.0
    %250 = vmatpush.msra.mxu0 0.0
    %251 = vmatpush.msra.mxu0 0.0
    %252 = vmatpush.msra.mxu0 0.0
    %253 = vmatpush.msra.mxu0 0.0
    %254 = vmatpush.msra.mxu0 0.0
    %255 = vmatpush.msra.mxu0 0.0
    %256 = vmatpush.msra.mxu0 %v236
    %257 = vmatmul.f32.gmra.mxu0 %v239
    %v258 = vpop.f32.mrf.mxu0
    %v259 = vadd.f32 0.0, %v258
    %260 = vdwg.mxu0
    %261 = vrot.lane.b32.xlu0 %v148, 64
    %v262 = vpop.permute.xlu0 %261
    %v265 = vsel %vm159, %v234, 0
    %267 = vmatpush.msra.mxu0 0.0
    %268 = vmatpush.msra.mxu0 0.0
    %269 = vmatpush.msra.mxu0 0.0
    %270 = vmatpush.msra.mxu0 0.0
    %271 = vmatpush.msra.mxu0 0.0
    %272 = vmatpush.msra.mxu0 0.0
    %273 = vmatpush.msra.mxu0 0.0
    %274 = vmatpush.msra.mxu0 0.0
    %275 = vmatpush.msra.mxu0 0.0
    %276 = vmatpush.msra.mxu0 0.0
    %277 = vmatpush.msra.mxu0 0.0
    %278 = vmatpush.msra.mxu0 0.0
    %279 = vmatpush.msra.mxu0 0.0
    %280 = vmatpush.msra.mxu0 0.0
    %281 = vmatpush.msra.mxu0 0.0
    %282 = vmatpush.msra.mxu0 %v262
    %283 = vmatmul.f32.gmra.mxu0 %v265
    %v284 = vpop.f32.mrf.mxu0
    %v285 = vadd.f32 0.0, %v284
    %286 = vdwg.mxu0
    %287 = vrot.lane.b32.xlu0 %v150, 120
    %v288 = vpop.permute.xlu0 %287
    %289 = vrot.lane.b32.xlu0 %v145, 88
    %v290 = vpop.permute.xlu0 %289
    %v291 = vsel %vm159, %v288, 0
    %v293 = vsel %vm159, %v290, 0
    %295 = vmatpush.xpose.msra.mxu0 0.0
    %296 = vmatpush.xpose.msra.mxu0 0.0
    %297 = vmatpush.xpose.msra.mxu0 0.0
    %298 = vmatpush.xpose.msra.mxu0 0.0
    %299 = vmatpush.xpose.msra.mxu0 0.0
    %300 = vmatpush.xpose.msra.mxu0 0.0
    %301 = vmatpush.xpose.msra.mxu0 0.0
    %302 = vmatpush.xpose.msra.mxu0 0.0
    %303 = vmatpush.xpose.msra.mxu0 0.0
    %304 = vmatpush.xpose.msra.mxu0 0.0
    %305 = vmatpush.xpose.msra.mxu0 0.0
    %306 = vmatpush.xpose.msra.mxu0 0.0
    %307 = vmatpush.xpose.msra.mxu0 0.0
    %308 = vmatpush.xpose.msra.mxu0 0.0
    %309 = vmatpush.xpose.msra.mxu0 0.0
    %310 = vmatpush.xpose.msra.mxu0 %v293
    %311 = vmatmul.f32.gmra.mxu0 %v291
    %v312 = vpop.f32.mrf.mxu0
    %v313 = vadd.f32 %v49, %v312
    %314 = vdwg.mxu0
    %315 = vrot.lane.b32.xlu0 %v151, 120
    %v316 = vpop.permute.xlu0 %315
    %317 = vrot.lane.b32.xlu0 %v148, 88
    %v318 = vpop.permute.xlu0 %317
    %v319 = vsel %vm159, %v316, 0
    %v321 = vsel %vm159, %v318, 0
    %323 = vmatpush.xpose.msra.mxu0 0.0
    %324 = vmatpush.xpose.msra.mxu0 0.0
    %325 = vmatpush.xpose.msra.mxu0 0.0
    %326 = vmatpush.xpose.msra.mxu0 0.0
    %327 = vmatpush.xpose.msra.mxu0 0.0
    %328 = vmatpush.xpose.msra.mxu0 0.0
    %329 = vmatpush.xpose.msra.mxu0 0.0
    %330 = vmatpush.xpose.msra.mxu0 0.0
    %331 = vmatpush.xpose.msra.mxu0 0.0
    %332 = vmatpush.xpose.msra.mxu0 0.0
    %333 = vmatpush.xpose.msra.mxu0 0.0
    %334 = vmatpush.xpose.msra.mxu0 0.0
    %335 = vmatpush.xpose.msra.mxu0 0.0
    %336 = vmatpush.xpose.msra.mxu0 0.0
    %337 = vmatpush.xpose.msra.mxu0 0.0
    %338 = vmatpush.xpose.msra.mxu0 %v321
    %339 = vmatmul.f32.gmra.mxu0 %v319
    %v340 = vpop.f32.mrf.mxu0
    %v341 = vadd.f32 %v49, %v340
    %342 = vdwg.mxu0
    %v343 = vsel %vm159, %v313, -inf
    %344 = vmax.xlane.f32.xlu0 %v343
    %v345 = vpop.xlane.xlu0 %344
    %v346 = vsel %vm159, %v341, -inf
    %347 = vmax.xlane.f32.xlu0 %v346
    %v348 = vpop.xlane.xlu0 %347
    %v349 = vsub.f32 %v313, %v345
    %v350 = vsub.f32 %v341, %v348
    %v351 = vmul.f32 %v349, 1.442695
    %v352 = vpow.pop %v351
    %v353 = vmul.f32 %v350, 1.442695
    %v354 = vpow.pop %v353
    %v355 = vsel %vm159, %v352, 0.0
    %356 = vadd.xlane.f32.xlu0 %v355
    %v357 = vpop.xlane.xlu0 %356
    %v358 = vsel %vm159, %v354, 0.0
    %359 = vadd.xlane.f32.xlu0 %v358
    %v360 = vpop.xlane.xlu0 %359
    %v361 = vrcp.pop %v357
    %v362 = vrcp.pop %v360
    %v363 = vmul.f32 %v352, %v361
    %v364 = vmul.f32 %v354, %v362
    %365 = vrot.lane.b32.xlu0 %v145, 56
    %v366 = vpop.permute.xlu0 %365
    %v369 = vsel %vm159, %v363, 0
    %371 = vmatpush.msra.mxu0 0.0
    %372 = vmatpush.msra.mxu0 0.0
    %373 = vmatpush.msra.mxu0 0.0
    %374 = vmatpush.msra.mxu0 0.0
    %375 = vmatpush.msra.mxu0 0.0
    %376 = vmatpush.msra.mxu0 0.0
    %377 = vmatpush.msra.mxu0 0.0
    %378 = vmatpush.msra.mxu0 0.0
    %379 = vmatpush.msra.mxu0 0.0
    %380 = vmatpush.msra.mxu0 0.0
    %381 = vmatpush.msra.mxu0 0.0
    %382 = vmatpush.msra.mxu0 0.0
    %383 = vmatpush.msra.mxu0 0.0
    %384 = vmatpush.msra.mxu0 0.0
    %385 = vmatpush.msra.mxu0 0.0
    %386 = vmatpush.msra.mxu0 %v366
    %387 = vmatmul.f32.gmra.mxu0 %v369
    %v388 = vpop.f32.mrf.mxu0
    %v389 = vadd.f32 0.0, %v388
    %390 = vdwg.mxu0
    %391 = vrot.lane.b32.xlu0 %v148, 56
    %v392 = vpop.permute.xlu0 %391
    %v395 = vsel %vm159, %v364, 0
    %397 = vmatpush.msra.mxu0 0.0
    %398 = vmatpush.msra.mxu0 0.0
    %399 = vmatpush.msra.mxu0 0.0
    %400 = vmatpush.msra.mxu0 0.0
    %401 = vmatpush.msra.mxu0 0.0
    %402 = vmatpush.msra.mxu0 0.0
    %403 = vmatpush.msra.mxu0 0.0
    %404 = vmatpush.msra.mxu0 0.0
    %405 = vmatpush.msra.mxu0 0.0
    %406 = vmatpush.msra.mxu0 0.0
    %407 = vmatpush.msra.mxu0 0.0
    %408 = vmatpush.msra.mxu0 0.0
    %409 = vmatpush.msra.mxu0 0.0
    %410 = vmatpush.msra.mxu0 0.0
    %411 = vmatpush.msra.mxu0 0.0
    %412 = vmatpush.msra.mxu0 %v392
    %413 = vmatmul.f32.gmra.mxu0 %v395
    %v414 = vpop.f32.mrf.mxu0
    %v415 = vadd.f32 0.0, %v414
    %416 = vdwg.mxu0
    %v418 = vsel %vm159, %v389, 0
    %v421 = vsel %vm159, %v415, 0
    %423 = vmatpush.msra.mxu0 0.0
    %424 = vmatpush.msra.mxu0 0.0
    %425 = vmatpush.msra.mxu0 0.0
    %426 = vmatpush.msra.mxu0 0.0
    %427 = vmatpush.msra.mxu0 0.0
    %428 = vmatpush.msra.mxu0 0.0
    %429 = vmatpush.msra.mxu0 0.0
    %430 = vmatpush.msra.mxu0 0.0
    %431 = vmatpush.msra.mxu0 0.0
    %432 = vmatpush.msra.mxu0 0.0
    %433 = vmatpush.msra.mxu0 0.0
    %434 = vmatpush.msra.mxu0 0.0
    %435 = vmatpush.msra.mxu0 0.0
    %436 = vmatpush.msra.mxu0 0.0
    %437 = vmatpush.msra.mxu0 0.0
    %438 = vmatpush.msra.mxu0 %v153
    %439 = vmatmul.f32.gmra.mxu0 %v418
    %v440 = vpop.f32.mrf.mxu0
    %v441 = vadd.f32 0.0, %v440
    %442 = vmatmul.f32.gmra.mxu0 %v421
    %v443 = vpop.f32.mrf.mxu0
    %v444 = vadd.f32 0.0, %v443
    %445 = vdwg.mxu0
    %v447 = vsel %vm159, %v259, 0
    %v450 = vsel %vm159, %v285, 0
    %452 = vmatpush.msra.mxu0 0.0
    %453 = vmatpush.msra.mxu0 0.0
    %454 = vmatpush.msra.mxu0 0.0
    %455 = vmatpush.msra.mxu0 0.0
    %456 = vmatpush.msra.mxu0 0.0
    %457 = vmatpush.msra.mxu0 0.0
    %458 = vmatpush.msra.mxu0 0.0
    %459 = vmatpush.msra.mxu0 0.0
    %460 = vmatpush.msra.mxu0 0.0
    %461 = vmatpush.msra.mxu0 0.0
    %462 = vmatpush.msra.mxu0 0.0
    %463 = vmatpush.msra.mxu0 0.0
    %464 = vmatpush.msra.mxu0 0.0
    %465 = vmatpush.msra.mxu0 0.0
    %466 = vmatpush.msra.mxu0 0.0
    %467 = vmatpush.msra.mxu0 %v152
    %468 = vmatmul.f32.gmra.mxu0 %v447
    %v469 = vpop.f32.mrf.mxu0
    %v470 = vadd.f32 %v441, %v469
    %471 = vmatmul.f32.gmra.mxu0 %v450
    %v472 = vpop.f32.mrf.mxu0
    %v473 = vadd.f32 %v444, %v472
    %474 = vdwg.mxu0
    %475 = vrot.lane.b32.xlu0 %v150, 112
    %v476 = vpop.permute.xlu0 %475
    %477 = vrot.lane.b32.xlu0 %v145, 80
    %v478 = vpop.permute.xlu0 %477
    %v479 = vsel %vm159, %v476, 0
    %v481 = vsel %vm159, %v478, 0
    %483 = vmatpush.xpose.msra.mxu0 0.0
    %484 = vmatpush.xpose.msra.mxu0 0.0
    %485 = vmatpush.xpose.msra.mxu0 0.0
    %486 = vmatpush.xpose.msra.mxu0 0.0
    %487 = vmatpush.xpose.msra.mxu0 0.0
    %488 = vmatpush.xpose.msra.mxu0 0.0
    %489 = vmatpush.xpose.msra.mxu0 0.0
    %490 = vmatpush.xpose.msra.mxu0 0.0
    %491 = vmatpush.xpose.msra.mxu0 0.0
    %492 = vmatpush.xpose.msra.mxu0 0.0
    %493 = vmatpush.xpose.msra.mxu0 0.0
    %494 = vmatpush.xpose.msra.mxu0 0.0
    %495 = vmatpush.xpose.msra.mxu0 0.0
    %496 = vmatpush.xpose.msra.mxu0 0.0
    %497 = vmatpush.xpose.msra.mxu0 0.0
    %498 = vmatpush.xpose.msra.mxu0 %v481
    %499 = vmatmul.f32.gmra.mxu0 %v479
    %v500 = vpop.f32.mrf.mxu0
    %v501 = vadd.f32 %v49, %v500
    %502 = vdwg.mxu0
    %503 = vrot.lane.b32.xlu0 %v151, 112
    %v504 = vpop.permute.xlu0 %503
    %505 = vrot.lane.b32.xlu0 %v148, 80
    %v506 = vpop.permute.xlu0 %505
    %v507 = vsel %vm159, %v504, 0
    %v509 = vsel %vm159, %v506, 0
    %511 = vmatpush.xpose.msra.mxu0 0.0
    %512 = vmatpush.xpose.msra.mxu0 0.0
    %513 = vmatpush.xpose.msra.mxu0 0.0
    %514 = vmatpush.xpose.msra.mxu0 0.0
    %515 = vmatpush.xpose.msra.mxu0 0.0
    %516 = vmatpush.xpose.msra.mxu0 0.0
    %517 = vmatpush.xpose.msra.mxu0 0.0
    %518 = vmatpush.xpose.msra.mxu0 0.0
    %519 = vmatpush.xpose.msra.mxu0 0.0
    %520 = vmatpush.xpose.msra.mxu0 0.0
    %521 = vmatpush.xpose.msra.mxu0 0.0
    %522 = vmatpush.xpose.msra.mxu0 0.0
    %523 = vmatpush.xpose.msra.mxu0 0.0
    %524 = vmatpush.xpose.msra.mxu0 0.0
    %525 = vmatpush.xpose.msra.mxu0 0.0
    %526 = vmatpush.xpose.msra.mxu0 %v509
    %527 = vmatmul.f32.gmra.mxu0 %v507
    %v528 = vpop.f32.mrf.mxu0
    %v529 = vadd.f32 %v49, %v528
    %530 = vdwg.mxu0
    %v531 = vsel %vm159, %v501, -inf
    %532 = vmax.xlane.f32.xlu0 %v531
    %v533 = vpop.xlane.xlu0 %532
    %v534 = vsel %vm159, %v529, -inf
    %535 = vmax.xlane.f32.xlu0 %v534
    %v536 = vpop.xlane.xlu0 %535
    %v537 = vsub.f32 %v501, %v533
    %v538 = vsub.f32 %v529, %v536
    %v539 = vmul.f32 %v537, 1.442695
    %v540 = vpow.pop %v539
    %v541 = vmul.f32 %v538, 1.442695
    %v542 = vpow.pop %v541
    %v543 = vsel %vm159, %v540, 0.0
    %544 = vadd.xlane.f32.xlu0 %v543
    %v545 = vpop.xlane.xlu0 %544
    %v546 = vsel %vm159, %v542, 0.0
    %547 = vadd.xlane.f32.xlu0 %v546
    %v548 = vpop.xlane.xlu0 %547
    %v549 = vrcp.pop %v545
    %v550 = vrcp.pop %v548
    %v551 = vmul.f32 %v540, %v549
    %v552 = vmul.f32 %v542, %v550
    %553 = vrot.lane.b32.xlu0 %v145, 48
    %v554 = vpop.permute.xlu0 %553
    %v557 = vsel %vm159, %v551, 0
    %559 = vmatpush.msra.mxu0 0.0
    %560 = vmatpush.msra.mxu0 0.0
    %561 = vmatpush.msra.mxu0 0.0
    %562 = vmatpush.msra.mxu0 0.0
    %563 = vmatpush.msra.mxu0 0.0
    %564 = vmatpush.msra.mxu0 0.0
    %565 = vmatpush.msra.mxu0 0.0
    %566 = vmatpush.msra.mxu0 0.0
    %567 = vmatpush.msra.mxu0 0.0
    %568 = vmatpush.msra.mxu0 0.0
    %569 = vmatpush.msra.mxu0 0.0
    %570 = vmatpush.msra.mxu0 0.0
    %571 = vmatpush.msra.mxu0 0.0
    %572 = vmatpush.msra.mxu0 0.0
    %573 = vmatpush.msra.mxu0 0.0
    %574 = vmatpush.msra.mxu0 %v554
    %575 = vmatmul.f32.gmra.mxu0 %v557
    %v576 = vpop.f32.mrf.mxu0
    %v577 = vadd.f32 0.0, %v576
    %578 = vdwg.mxu0
    %579 = vrot.lane.b32.xlu0 %v148, 48
    %v580 = vpop.permute.xlu0 %579
    %v583 = vsel %vm159, %v552, 0
    %585 = vmatpush.msra.mxu0 0.0
    %586 = vmatpush.msra.mxu0 0.0
    %587 = vmatpush.msra.mxu0 0.0
    %588 = vmatpush.msra.mxu0 0.0
    %589 = vmatpush.msra.mxu0 0.0
    %590 = vmatpush.msra.mxu0 0.0
    %591 = vmatpush.msra.mxu0 0.0
    %592 = vmatpush.msra.mxu0 0.0
    %593 = vmatpush.msra.mxu0 0.0
    %594 = vmatpush.msra.mxu0 0.0
    %595 = vmatpush.msra.mxu0 0.0
    %596 = vmatpush.msra.mxu0 0.0
    %597 = vmatpush.msra.mxu0 0.0
    %598 = vmatpush.msra.mxu0 0.0
    %599 = vmatpush.msra.mxu0 0.0
    %600 = vmatpush.msra.mxu0 %v580
    %601 = vmatmul.f32.gmra.mxu0 %v583
    %v602 = vpop.f32.mrf.mxu0
    %v603 = vadd.f32 0.0, %v602
    %604 = vdwg.mxu0
    %v606 = vsel %vm159, %v577, 0
    %v609 = vsel %vm159, %v603, 0
    %611 = vmatpush.msra.mxu0 0.0
    %612 = vmatpush.msra.mxu0 0.0
    %613 = vmatpush.msra.mxu0 0.0
    %614 = vmatpush.msra.mxu0 0.0
    %615 = vmatpush.msra.mxu0 0.0
    %616 = vmatpush.msra.mxu0 0.0
    %617 = vmatpush.msra.mxu0 0.0
    %618 = vmatpush.msra.mxu0 0.0
    %619 = vmatpush.msra.mxu0 0.0
    %620 = vmatpush.msra.mxu0 0.0
    %621 = vmatpush.msra.mxu0 0.0
    %622 = vmatpush.msra.mxu0 0.0
    %623 = vmatpush.msra.mxu0 0.0
    %624 = vmatpush.msra.mxu0 0.0
    %625 = vmatpush.msra.mxu0 0.0
    %626 = vmatpush.msra.mxu0 %v154
    %627 = vmatmul.f32.gmra.mxu0 %v606
    %v628 = vpop.f32.mrf.mxu0
    %v629 = vadd.f32 0.0, %v628
    %630 = vmatmul.f32.gmra.mxu0 %v609
    %v631 = vpop.f32.mrf.mxu0
    %v632 = vadd.f32 0.0, %v631
    %633 = vdwg.mxu0
    %v634 = vadd.f32 %v470, %v629
    %v635 = vadd.f32 %v473, %v632
    %636 = vrot.lane.b32.xlu0 %v150, 104
    %v637 = vpop.permute.xlu0 %636
    %638 = vrot.lane.b32.xlu0 %v145, 72
    %v639 = vpop.permute.xlu0 %638
    %v640 = vsel %vm159, %v637, 0
    %v642 = vsel %vm159, %v639, 0
    %644 = vmatpush.xpose.msra.mxu0 0.0
    %645 = vmatpush.xpose.msra.mxu0 0.0
    %646 = vmatpush.xpose.msra.mxu0 0.0
    %647 = vmatpush.xpose.msra.mxu0 0.0
    %648 = vmatpush.xpose.msra.mxu0 0.0
    %649 = vmatpush.xpose.msra.mxu0 0.0
    %650 = vmatpush.xpose.msra.mxu0 0.0
    %651 = vmatpush.xpose.msra.mxu0 0.0
    %652 = vmatpush.xpose.msra.mxu0 0.0
    %653 = vmatpush.xpose.msra.mxu0 0.0
    %654 = vmatpush.xpose.msra.mxu0 0.0
    %655 = vmatpush.xpose.msra.mxu0 0.0
    %656 = vmatpush.xpose.msra.mxu0 0.0
    %657 = vmatpush.xpose.msra.mxu0 0.0
    %658 = vmatpush.xpose.msra.mxu0 0.0
    %659 = vmatpush.xpose.msra.mxu0 %v642
    %660 = vmatmul.f32.gmra.mxu0 %v640
    %v661 = vpop.f32.mrf.mxu0
    %v662 = vadd.f32 %v49, %v661
    %663 = vdwg.mxu0
    %664 = vrot.lane.b32.xlu0 %v151, 104
    %v665 = vpop.permute.xlu0 %664
    %666 = vrot.lane.b32.xlu0 %v148, 72
    %v667 = vpop.permute.xlu0 %666
    %v668 = vsel %vm159, %v665, 0
    %v670 = vsel %vm159, %v667, 0
    %672 = vmatpush.xpose.msra.mxu0 0.0
    %673 = vmatpush.xpose.msra.mxu0 0.0
    %674 = vmatpush.xpose.msra.mxu0 0.0
    %675 = vmatpush.xpose.msra.mxu0 0.0
    %676 = vmatpush.xpose.msra.mxu0 0.0
    %677 = vmatpush.xpose.msra.mxu0 0.0
    %678 = vmatpush.xpose.msra.mxu0 0.0
    %679 = vmatpush.xpose.msra.mxu0 0.0
    %680 = vmatpush.xpose.msra.mxu0 0.0
    %681 = vmatpush.xpose.msra.mxu0 0.0
    %682 = vmatpush.xpose.msra.mxu0 0.0
    %683 = vmatpush.xpose.msra.mxu0 0.0
    %684 = vmatpush.xpose.msra.mxu0 0.0
    %685 = vmatpush.xpose.msra.mxu0 0.0
    %686 = vmatpush.xpose.msra.mxu0 0.0
    %687 = vmatpush.xpose.msra.mxu0 %v670
    %688 = vmatmul.f32.gmra.mxu0 %v668
    %v689 = vpop.f32.mrf.mxu0
    %v690 = vadd.f32 %v49, %v689
    %691 = vdwg.mxu0
    %v692 = vsel %vm159, %v662, -inf
    %693 = vmax.xlane.f32.xlu0 %v692
    %v694 = vpop.xlane.xlu0 %693
    %v695 = vsel %vm159, %v690, -inf
    %696 = vmax.xlane.f32.xlu0 %v695
    %v697 = vpop.xlane.xlu0 %696
    %v698 = vsub.f32 %v662, %v694
    %v699 = vsub.f32 %v690, %v697
    %v700 = vmul.f32 %v698, 1.442695
    %v701 = vpow.pop %v700
    %v702 = vmul.f32 %v699, 1.442695
    %v703 = vpow.pop %v702
    %v704 = vsel %vm159, %v701, 0.0
    %705 = vadd.xlane.f32.xlu0 %v704
    %v706 = vpop.xlane.xlu0 %705
    %v707 = vsel %vm159, %v703, 0.0
    %708 = vadd.xlane.f32.xlu0 %v707
    %v709 = vpop.xlane.xlu0 %708
    %v710 = vrcp.pop %v706
    %v711 = vrcp.pop %v709
    %v712 = vmul.f32 %v701, %v710
    %v713 = vmul.f32 %v703, %v711
    %714 = vrot.lane.b32.xlu0 %v145, 40
    %v715 = vpop.permute.xlu0 %714
    %v718 = vsel %vm159, %v712, 0
    %720 = vmatpush.msra.mxu0 0.0
    %721 = vmatpush.msra.mxu0 0.0
    %722 = vmatpush.msra.mxu0 0.0
    %723 = vmatpush.msra.mxu0 0.0
    %724 = vmatpush.msra.mxu0 0.0
    %725 = vmatpush.msra.mxu0 0.0
    %726 = vmatpush.msra.mxu0 0.0
    %727 = vmatpush.msra.mxu0 0.0
    %728 = vmatpush.msra.mxu0 0.0
    %729 = vmatpush.msra.mxu0 0.0
    %730 = vmatpush.msra.mxu0 0.0
    %731 = vmatpush.msra.mxu0 0.0
    %732 = vmatpush.msra.mxu0 0.0
    %733 = vmatpush.msra.mxu0 0.0
    %734 = vmatpush.msra.mxu0 0.0
    %735 = vmatpush.msra.mxu0 %v715
    %736 = vmatmul.f32.gmra.mxu0 %v718
    %v737 = vpop.f32.mrf.mxu0
    %v738 = vadd.f32 0.0, %v737
    %739 = vdwg.mxu0
    %740 = vrot.lane.b32.xlu0 %v148, 40
    %v741 = vpop.permute.xlu0 %740
    %v744 = vsel %vm159, %v713, 0
    %746 = vmatpush.msra.mxu0 0.0
    %747 = vmatpush.msra.mxu0 0.0
    %748 = vmatpush.msra.mxu0 0.0
    %749 = vmatpush.msra.mxu0 0.0
    %750 = vmatpush.msra.mxu0 0.0
    %751 = vmatpush.msra.mxu0 0.0
    %752 = vmatpush.msra.mxu0 0.0
    %753 = vmatpush.msra.mxu0 0.0
    %754 = vmatpush.msra.mxu0 0.0
    %755 = vmatpush.msra.mxu0 0.0
    %756 = vmatpush.msra.mxu0 0.0
    %757 = vmatpush.msra.mxu0 0.0
    %758 = vmatpush.msra.mxu0 0.0
    %759 = vmatpush.msra.mxu0 0.0
    %760 = vmatpush.msra.mxu0 0.0
    %761 = vmatpush.msra.mxu0 %v741
    %762 = vmatmul.f32.gmra.mxu0 %v744
    %v763 = vpop.f32.mrf.mxu0
    %v764 = vadd.f32 0.0, %v763
    %765 = vdwg.mxu0
    %v767 = vsel %vm159, %v738, 0
    %v770 = vsel %vm159, %v764, 0
    %772 = vmatpush.msra.mxu0 0.0
    %773 = vmatpush.msra.mxu0 0.0
    %774 = vmatpush.msra.mxu0 0.0
    %775 = vmatpush.msra.mxu0 0.0
    %776 = vmatpush.msra.mxu0 0.0
    %777 = vmatpush.msra.mxu0 0.0
    %778 = vmatpush.msra.mxu0 0.0
    %779 = vmatpush.msra.mxu0 0.0
    %780 = vmatpush.msra.mxu0 0.0
    %781 = vmatpush.msra.mxu0 0.0
    %782 = vmatpush.msra.mxu0 0.0
    %783 = vmatpush.msra.mxu0 0.0
    %784 = vmatpush.msra.mxu0 0.0
    %785 = vmatpush.msra.mxu0 0.0
    %786 = vmatpush.msra.mxu0 0.0
    %787 = vmatpush.msra.mxu0 %v155
    %788 = vmatmul.f32.gmra.mxu0 %v767
    %v789 = vpop.f32.mrf.mxu0
    %v790 = vadd.f32 0.0, %v789
    %791 = vmatmul.f32.gmra.mxu0 %v770
    %v792 = vpop.f32.mrf.mxu0
    %v793 = vadd.f32 0.0, %v792
    %794 = vdwg.mxu0
    %v795 = vadd.f32 %v634, %v790
    %v796 = vadd.f32 %v635, %v793
    %v797 = vadd.f32 %v42, %v795
    %v798 = vadd.f32 %v43, %v796
    %v799 = vperm.slane %v52, 0
    %v800 = vadd.f32 %v797, %v799
    %v801 = vadd.f32 %v798, %v799
    %v802 = vsel %vm58, %v800, 0.0
    %803 = vadd.xlane.f32.xlu0 %v802
    %v804 = vpop.xlane.xlu0 %803
    %v805 = vsel %vm58, %v801, 0.0
    %806 = vadd.xlane.f32.xlu0 %v805
    %v807 = vpop.xlane.xlu0 %806
    %v808 = vmul.f32 %v804, %v71
    %v809 = vmul.f32 %v807, %v71
    %v810 = vsub.f32 %v800, %v808
    %v811 = vsub.f32 %v801, %v809
    %v812 = vmul.f32 %v810, %v810
    %v813 = vmul.f32 %v811, %v811
    %v814 = vsel %vm58, %v812, 0.0
    %815 = vadd.xlane.f32.xlu0 %v814
    %v816 = vpop.xlane.xlu0 %815
    %v817 = vsel %vm58, %v813, 0.0
    %818 = vadd.xlane.f32.xlu0 %v817
    %v819 = vpop.xlane.xlu0 %818
    %v820 = vmul.f32 %v816, %v71
    %v821 = vmul.f32 %v819, %v71
    %v822 = vadd.f32 %v820, 1e-05
    %v823 = vadd.f32 %v821, 1e-05
    %v824 = vrsqrt.pop %v822
    %v825 = vmul.f32 %v824, %v822
    %v826 = vmul.f32 %v825, %v824
    %v827 = vmul.f32 0.5, %v826
    %v828 = vsub.f32 1.5, %v827
    %v829 = vmul.f32 %v824, %v828
    %vm830 = vweird.f32 %v822
    %vm831 = vweird.f32 %v824
    %vm832 = vmor %vm830, %vm831
    %v833 = vsel %vm832, %v824, %v829
    %v834 = vrsqrt.pop %v823
    %v835 = vmul.f32 %v834, %v823
    %v836 = vmul.f32 %v835, %v834
    %v837 = vmul.f32 0.5, %v836
    %v838 = vsub.f32 1.5, %v837
    %v839 = vmul.f32 %v834, %v838
    %vm840 = vweird.f32 %v823
    %vm841 = vweird.f32 %v834
    %vm842 = vmor %vm840, %vm841
    %v843 = vsel %vm842, %v834, %v839
    %v844 = vmul.f32 %v810, %v833
    %v845 = vmul.f32 %v811, %v843
    %v846 = vperm.slane %v53, 0
    %v847 = vmul.f32 %v844, %v846
    %v848 = vmul.f32 %v845, %v846
    %v849 = vperm.slane %v54, 0
    %v850 = vadd.f32 %v847, %v849
    %v851 = vadd.f32 %v848, %v849
    %v852 = vld [vmem:[%s4] sm:$0xff]
    %v853 = vld [vmem:[%s4 + $0x8] sm:$0xff]
    %v854 = vld [vmem:[%s4 + $0x10] sm:$0xff]
    %v855 = vld [vmem:[%s4 + $0x18] sm:$0xff]
    %v856 = vperm.slane %v57, 0
    %v858 = vsel %vm58, %v850, 0
    %v861 = vsel %vm58, %v851, 0
    %863 = vmatpush.msra.mxu0 0.0
    %864 = vmatpush.msra.mxu0 0.0
    %865 = vmatpush.msra.mxu0 0.0
    %866 = vmatpush.msra.mxu0 0.0
    %867 = vmatpush.msra.mxu0 0.0
    %868 = vmatpush.msra.mxu0 0.0
    %869 = vmatpush.msra.mxu0 0.0
    %870 = vmatpush.msra.mxu0 0.0
    %871 = vmatpush.msra.mxu0 0.0
    %872 = vmatpush.msra.mxu0 0.0
    %873 = vmatpush.msra.mxu0 0.0
    %874 = vmatpush.msra.mxu0 0.0
    %875 = vmatpush.msra.mxu0 %v855
    %876 = vmatpush.msra.mxu0 %v854
    %877 = vmatpush.msra.mxu0 %v853
    %878 = vmatpush.msra.mxu0 %v852
    %879 = vmatmul.f32.gmra.mxu0 %v858
    %v880 = vpop.f32.mrf.mxu0
    %v881 = vadd.f32 %v856, %v880
    %882 = vmatmul.f32.gmra.mxu0 %v861
    %v883 = vpop.f32.mrf.mxu0
    %v884 = vadd.f32 %v856, %v883
    %885 = vdwg.mxu0
    %v886 = vmul.f32 %v881, 1.702
    %v887 = vmul.f32 %v884, 1.702
    %v888 = vxor.u32 %v886, 2147483648
    %v889 = vxor.u32 %v887, 2147483648
    %v890 = vmul.f32 %v888, 1.442695
    %v891 = vpow.pop %v890
    %v892 = vmul.f32 %v889, 1.442695
    %v893 = vpow.pop %v892
    %v894 = vadd.f32 %v891, 1.0
    %v895 = vadd.f32 %v893, 1.0
    %v896 = vrcp.pop %v894
    %v897 = vmul.f32 %v894, %v896
    %v898 = vsub.f32 1.0, %v897
    %v899 = vmul.f32 %v896, %v898
    %v900 = vadd.f32 %v896, %v899
    %vm901 = vweird.f32 %v894
    %vm902 = vweird.f32 %v896
    %vm903 = vmor %vm901, %vm902
    %v904 = vsel %vm903, %v896, %v900
    %v905 = vand.u32 2147483647, %v894
    %vm906 = vcmp.eq.f32.partialorder %v905, 8.507059e+37
    %v907 = vand.u32 %v894, 2147483648
    %v908 = vor.u32 1.1754944e-38, %v907
    %v909 = vsel %vm906, %v908, %v904
    %v910 = vmul.f32 1.0, %v909
    %v911 = vrcp.pop %v895
    %v912 = vmul.f32 %v895, %v911
    %v913 = vsub.f32 1.0, %v912
    %v914 = vmul.f32 %v911, %v913
    %v915 = vadd.f32 %v911, %v914
    %vm916 = vweird.f32 %v895
    %vm917 = vweird.f32 %v911
    %vm918 = vmor %vm916, %vm917
    %v919 = vsel %vm918, %v911, %v915
    %v920 = vand.u32 2147483647, %v895
    %vm921 = vcmp.eq.f32.partialorder %v920, 8.507059e+37
    %v922 = vand.u32 %v895, 2147483648
    %v923 = vor.u32 1.1754944e-38, %v922
    %v924 = vsel %vm921, %v923, %v919
    %v925 = vmul.f32 1.0, %v924
    %v926 = vmul.f32 %v881, %v910
    %v927 = vmul.f32 %v884, %v925
    %v928 = vld [vmem:[%s5] sm:$0xff]
    %v929 = vld [vmem:[%s5 + $0x8] sm:$0xff]
    %v930 = vld [vmem:[%s5 + $0x10] sm:$0xff]
    %v931 = vld [vmem:[%s5 + $0x18] sm:$0xff]
    %v932 = vld [vmem:[%s5 + $0x20] sm:$0xff]
    %v933 = vld [vmem:[%s5 + $0x28] sm:$0xff]
    %v934 = vld [vmem:[%s5 + $0x30] sm:$0xff]
    %v935 = vld [vmem:[%s5 + $0x38] sm:$0xff]
    %v936 = vld [vmem:[%s5 + $0x40] sm:$0xff]
    %v937 = vld [vmem:[%s5 + $0x48] sm:$0xff]
    %v938 = vld [vmem:[%s5 + $0x50] sm:$0xff]
    %v939 = vld [vmem:[%s5 + $0x58] sm:$0xff]
    %v940 = vld [vmem:[%s5 + $0x60] sm:$0xff]
    %v941 = vld [vmem:[%s5 + $0x68] sm:$0xff]
    %v942 = vld [vmem:[%s5 + $0x70] sm:$0xff]
    %v943 = vld [vmem:[%s5 + $0x78] sm:$0xff]
    %v944 = vperm.slane %v55, 0
    %945 = vmatpush.msra.mxu0 %v943
    %946 = vmatpush.msra.mxu0 %v942
    %947 = vmatpush.msra.mxu0 %v941
    %948 = vmatpush.msra.mxu0 %v940
    %949 = vmatpush.msra.mxu0 %v939
    %950 = vmatpush.msra.mxu0 %v938
    %951 = vmatpush.msra.mxu0 %v937
    %952 = vmatpush.msra.mxu0 %v936
    %953 = vmatpush.msra.mxu0 %v935
    %954 = vmatpush.msra.mxu0 %v934
    %955 = vmatpush.msra.mxu0 %v933
    %956 = vmatpush.msra.mxu0 %v932
    %957 = vmatpush.msra.mxu0 %v931
    %958 = vmatpush.msra.mxu0 %v930
    %959 = vmatpush.msra.mxu0 %v929
    %960 = vmatpush.msra.mxu0 %v928
    %961 = vmatmul.f32.gmra.mxu0 %v926
    %v962 = vpop.f32.mrf.mxu0
    %v963 = vadd.f32 %v944, %v962
    %964 = vmatmul.f32.gmra.mxu0 %v927
    %v965 = vpop.f32.mrf.mxu0
    %v966 = vadd.f32 %v944, %v965
    %967 = vdwg.mxu0
    %v968 = vadd.f32 %v800, %v963
    %v969 = vadd.f32 %v801, %v966
    %s970 = scalar_lea.vmem %s6, 8
    %v971 = vld [vmem:[%s970] sm:$0x1]
    %v972 = vld [vmem:[%s970 + $0x1] sm:$0x1]
    %v973 = vld [vmem:[%s970 + $0x2] sm:$0x1]
    %v974 = vld [vmem:[%s970 + $0x3] sm:$0x1]
    %v975 = vld [vmem:[%s970 + $0x4] sm:$0x1]
    %v976 = vld [vmem:[%s970 + $0x5] sm:$0x1]
    %s977 = scalar_lea.vmem %s7, 2
    %v978 = vld [vmem:[%s977] sm:$0x1]
    %v979 = vld [vmem:[%s977 + $0x1] sm:$0x1]
    %v980 = vsel %vm58, %v968, 0.0
    %981 = vadd.xlane.f32.xlu0 %v980
    %v982 = vpop.xlane.xlu0 %981
    %v983 = vsel %vm58, %v969, 0.0
    %984 = vadd.xlane.f32.xlu0 %v983
    %v985 = vpop.xlane.xlu0 %984
    %v986 = vmul.f32 %v982, %v71
    %v987 = vmul.f32 %v985, %v71
    %v988 = vsub.f32 %v968, %v986
    %v989 = vsub.f32 %v969, %v987
    %v990 = vmul.f32 %v988, %v988
    %v991 = vmul.f32 %v989, %v989
    %v992 = vsel %vm58, %v990, 0.0
    %993 = vadd.xlane.f32.xlu0 %v992
    %v994 = vpop.xlane.xlu0 %993
    %v995 = vsel %vm58, %v991, 0.0
    %996 = vadd.xlane.f32.xlu0 %v995
    %v997 = vpop.xlane.xlu0 %996
    %v998 = vmul.f32 %v994, %v71
    %v999 = vmul.f32 %v997, %v71
    %v1000 = vadd.f32 %v998, 1e-05
    %v1001 = vadd.f32 %v999, 1e-05
    %v1002 = vrsqrt.pop %v1000
    %v1003 = vmul.f32 %v1002, %v1000
    %v1004 = vmul.f32 %v1003, %v1002
    %v1005 = vmul.f32 0.5, %v1004
    %v1006 = vsub.f32 1.5, %v1005
    %v1007 = vmul.f32 %v1002, %v1006
    %vm1008 = vweird.f32 %v1000
    %vm1009 = vweird.f32 %v1002
    %vm1010 = vmor %vm1008, %vm1009
    %v1011 = vsel %vm1010, %v1002, %v1007
    %v1012 = vrsqrt.pop %v1001
    %v1013 = vmul.f32 %v1012, %v1001
    %v1014 = vmul.f32 %v1013, %v1012
    %v1015 = vmul.f32 0.5, %v1014
    %v1016 = vsub.f32 1.5, %v1015
    %v1017 = vmul.f32 %v1012, %v1016
    %vm1018 = vweird.f32 %v1001
    %vm1019 = vweird.f32 %v1012
    %vm1020 = vmor %vm1018, %vm1019
    %v1021 = vsel %vm1020, %v1012, %v1017
    %v1022 = vmul.f32 %v988, %v1011
    %v1023 = vmul.f32 %v989, %v1021
    %v1024 = vperm.slane %v971, 0
    %v1025 = vmul.f32 %v1022, %v1024
    %v1026 = vmul.f32 %v1023, %v1024
    %v1027 = vperm.slane %v972, 0
    %v1028 = vadd.f32 %v1025, %v1027
    %v1029 = vadd.f32 %v1026, %v1027
    %s1030 = scalar_lea.vmem %s2, 32
    %v1031 = vld [vmem:[%s1030] sm:$0xff]
    %v1032 = vld [vmem:[%s1030 + $0x8] sm:$0xff]
    %v1033 = vld [vmem:[%s1030 + $0x10] sm:$0xff]
    %v1034 = vld [vmem:[%s1030 + $0x18] sm:$0xff]
    %v1035 = vperm.slane %v978, 0
    %v1037 = vsel %vm58, %v1028, 0
    %v1040 = vsel %vm58, %v1029, 0
    %1042 = vmatpush.msra.mxu0 0.0
    %1043 = vmatpush.msra.mxu0 0.0
    %1044 = vmatpush.msra.mxu0 0.0
    %1045 = vmatpush.msra.mxu0 0.0
    %1046 = vmatpush.msra.mxu0 0.0
    %1047 = vmatpush.msra.mxu0 0.0
    %1048 = vmatpush.msra.mxu0 0.0
    %1049 = vmatpush.msra.mxu0 0.0
    %1050 = vmatpush.msra.mxu0 0.0
    %1051 = vmatpush.msra.mxu0 0.0
    %1052 = vmatpush.msra.mxu0 0.0
    %1053 = vmatpush.msra.mxu0 0.0
    %1054 = vmatpush.msra.mxu0 %v1034
    %1055 = vmatpush.msra.mxu0 %v1033
    %1056 = vmatpush.msra.mxu0 %v1032
    %1057 = vmatpush.msra.mxu0 %v1031
    %1058 = vmatmul.f32.gmra.mxu0 %v1037
    %v1059 = vpop.f32.mrf.mxu0
    %v1060 = vadd.f32 %v1035, %v1059
    %1061 = vmatmul.f32.gmra.mxu0 %v1040
    %v1062 = vpop.f32.mrf.mxu0
    %v1063 = vadd.f32 %v1035, %v1062
    %1064 = vdwg.mxu0
    %v1065 = vmul.f32 %v1060, 0.35355338
    %v1066 = vmul.f32 %v1063, 0.35355338
    %s1067 = scalar_lea.vmem %s3, 32
    %v1068 = vld [vmem:[%s1067] sm:$0xff]
    %v1069 = vld [vmem:[%s1067 + $0x8] sm:$0xff]
    %v1070 = vld [vmem:[%s1067 + $0x10] sm:$0xff]
    %v1071 = vld [vmem:[%s1067 + $0x18] sm:$0xff]
    %1073 = vrot.lane.b32.xlu0 %v1060, 96
    %v1074 = vpop.permute.xlu0 %1073
    %v1076 = vsel %vm159, %v1065, 0
    %v1078 = vsel %vm159, %v1074, 0
    %1080 = vmatpush.xpose.msra.mxu0 0.0
    %1081 = vmatpush.xpose.msra.mxu0 0.0
    %1082 = vmatpush.xpose.msra.mxu0 0.0
    %1083 = vmatpush.xpose.msra.mxu0 0.0
    %1084 = vmatpush.xpose.msra.mxu0 0.0
    %1085 = vmatpush.xpose.msra.mxu0 0.0
    %1086 = vmatpush.xpose.msra.mxu0 0.0
    %1087 = vmatpush.xpose.msra.mxu0 0.0
    %1088 = vmatpush.xpose.msra.mxu0 0.0
    %1089 = vmatpush.xpose.msra.mxu0 0.0
    %1090 = vmatpush.xpose.msra.mxu0 0.0
    %1091 = vmatpush.xpose.msra.mxu0 0.0
    %1092 = vmatpush.xpose.msra.mxu0 0.0
    %1093 = vmatpush.xpose.msra.mxu0 0.0
    %1094 = vmatpush.xpose.msra.mxu0 0.0
    %1095 = vmatpush.xpose.msra.mxu0 %v1078
    %1096 = vmatmul.f32.gmra.mxu0 %v1076
    %v1097 = vpop.f32.mrf.mxu0
    %v1098 = vadd.f32 %v49, %v1097
    %1099 = vdwg.mxu0
    %1101 = vrot.lane.b32.xlu0 %v1063, 96
    %v1102 = vpop.permute.xlu0 %1101
    %v1104 = vsel %vm159, %v1066, 0
    %v1106 = vsel %vm159, %v1102, 0
    %1108 = vmatpush.xpose.msra.mxu0 0.0
    %1109 = vmatpush.xpose.msra.mxu0 0.0
    %1110 = vmatpush.xpose.msra.mxu0 0.0
    %1111 = vmatpush.xpose.msra.mxu0 0.0
    %1112 = vmatpush.xpose.msra.mxu0 0.0
    %1113 = vmatpush.xpose.msra.mxu0 0.0
    %1114 = vmatpush.xpose.msra.mxu0 0.0
    %1115 = vmatpush.xpose.msra.mxu0 0.0
    %1116 = vmatpush.xpose.msra.mxu0 0.0
    %1117 = vmatpush.xpose.msra.mxu0 0.0
    %1118 = vmatpush.xpose.msra.mxu0 0.0
    %1119 = vmatpush.xpose.msra.mxu0 0.0
    %1120 = vmatpush.xpose.msra.mxu0 0.0
    %1121 = vmatpush.xpose.msra.mxu0 0.0
    %1122 = vmatpush.xpose.msra.mxu0 0.0
    %1123 = vmatpush.xpose.msra.mxu0 %v1106
    %1124 = vmatmul.f32.gmra.mxu0 %v1104
    %v1125 = vpop.f32.mrf.mxu0
    %v1126 = vadd.f32 %v49, %v1125
    %1127 = vdwg.mxu0
    %v1128 = vsel %vm159, %v1098, -inf
    %1129 = vmax.xlane.f32.xlu0 %v1128
    %v1130 = vpop.xlane.xlu0 %1129
    %v1131 = vsel %vm159, %v1126, -inf
    %1132 = vmax.xlane.f32.xlu0 %v1131
    %v1133 = vpop.xlane.xlu0 %1132
    %v1134 = vsub.f32 %v1098, %v1130
    %v1135 = vsub.f32 %v1126, %v1133
    %v1136 = vmul.f32 %v1134, 1.442695
    %v1137 = vpow.pop %v1136
    %v1138 = vmul.f32 %v1135, 1.442695
    %v1139 = vpow.pop %v1138
    %v1140 = vsel %vm159, %v1137, 0.0
    %1141 = vadd.xlane.f32.xlu0 %v1140
    %v1142 = vpop.xlane.xlu0 %1141
    %v1143 = vsel %vm159, %v1139, 0.0
    %1144 = vadd.xlane.f32.xlu0 %v1143
    %v1145 = vpop.xlane.xlu0 %1144
    %v1146 = vrcp.pop %v1142
    %v1147 = vrcp.pop %v1145
    %v1148 = vmul.f32 %v1137, %v1146
    %v1149 = vmul.f32 %v1139, %v1147
    %1150 = vrot.lane.b32.xlu0 %v1060, 64
    %v1151 = vpop.permute.xlu0 %1150
    %v1154 = vsel %vm159, %v1148, 0
    %1156 = vmatpush.msra.mxu0 0.0
    %1157 = vmatpush.msra.mxu0 0.0
    %1158 = vmatpush.msra.mxu0 0.0
    %1159 = vmatpush.msra.mxu0 0.0
    %1160 = vmatpush.msra.mxu0 0.0
    %1161 = vmatpush.msra.mxu0 0.0
    %1162 = vmatpush.msra.mxu0 0.0
    %1163 = vmatpush.msra.mxu0 0.0
    %1164 = vmatpush.msra.mxu0 0.0
    %1165 = vmatpush.msra.mxu0 0.0
    %1166 = vmatpush.msra.mxu0 0.0
    %1167 = vmatpush.msra.mxu0 0.0
    %1168 = vmatpush.msra.mxu0 0.0
    %1169 = vmatpush.msra.mxu0 0.0
    %1170 = vmatpush.msra.mxu0 0.0
    %1171 = vmatpush.msra.mxu0 %v1151
    %1172 = vmatmul.f32.gmra.mxu0 %v1154
    %v1173 = vpop.f32.mrf.mxu0
    %v1174 = vadd.f32 0.0, %v1173
    %1175 = vdwg.mxu0
    %1176 = vrot.lane.b32.xlu0 %v1063, 64
    %v1177 = vpop.permute.xlu0 %1176
    %v1180 = vsel %vm159, %v1149, 0
    %1182 = vmatpush.msra.mxu0 0.0
    %1183 = vmatpush.msra.mxu0 0.0
    %1184 = vmatpush.msra.mxu0 0.0
    %1185 = vmatpush.msra.mxu0 0.0
    %1186 = vmatpush.msra.mxu0 0.0
    %1187 = vmatpush.msra.mxu0 0.0
    %1188 = vmatpush.msra.mxu0 0.0
    %1189 = vmatpush.msra.mxu0 0.0
    %1190 = vmatpush.msra.mxu0 0.0
    %1191 = vmatpush.msra.mxu0 0.0
    %1192 = vmatpush.msra.mxu0 0.0
    %1193 = vmatpush.msra.mxu0 0.0
    %1194 = vmatpush.msra.mxu0 0.0
    %1195 = vmatpush.msra.mxu0 0.0
    %1196 = vmatpush.msra.mxu0 0.0
    %1197 = vmatpush.msra.mxu0 %v1177
    %1198 = vmatmul.f32.gmra.mxu0 %v1180
    %v1199 = vpop.f32.mrf.mxu0
    %v1200 = vadd.f32 0.0, %v1199
    %1201 = vdwg.mxu0
    %1202 = vrot.lane.b32.xlu0 %v1065, 120
    %v1203 = vpop.permute.xlu0 %1202
    %1204 = vrot.lane.b32.xlu0 %v1060, 88
    %v1205 = vpop.permute.xlu0 %1204
    %v1206 = vsel %vm159, %v1203, 0
    %v1208 = vsel %vm159, %v1205, 0
    %1210 = vmatpush.xpose.msra.mxu0 0.0
    %1211 = vmatpush.xpose.msra.mxu0 0.0
    %1212 = vmatpush.xpose.msra.mxu0 0.0
    %1213 = vmatpush.xpose.msra.mxu0 0.0
    %1214 = vmatpush.xpose.msra.mxu0 0.0
    %1215 = vmatpush.xpose.msra.mxu0 0.0
    %1216 = vmatpush.xpose.msra.mxu0 0.0
    %1217 = vmatpush.xpose.msra.mxu0 0.0
    %1218 = vmatpush.xpose.msra.mxu0 0.0
    %1219 = vmatpush.xpose.msra.mxu0 0.0
    %1220 = vmatpush.xpose.msra.mxu0 0.0
    %1221 = vmatpush.xpose.msra.mxu0 0.0
    %1222 = vmatpush.xpose.msra.mxu0 0.0
    %1223 = vmatpush.xpose.msra.mxu0 0.0
    %1224 = vmatpush.xpose.msra.mxu0 0.0
    %1225 = vmatpush.xpose.msra.mxu0 %v1208
    %1226 = vmatmul.f32.gmra.mxu0 %v1206
    %v1227 = vpop.f32.mrf.mxu0
    %v1228 = vadd.f32 %v49, %v1227
    %1229 = vdwg.mxu0
    %1230 = vrot.lane.b32.xlu0 %v1066, 120
    %v1231 = vpop.permute.xlu0 %1230
    %1232 = vrot.lane.b32.xlu0 %v1063, 88
    %v1233 = vpop.permute.xlu0 %1232
    %v1234 = vsel %vm159, %v1231, 0
    %v1236 = vsel %vm159, %v1233, 0
    %1238 = vmatpush.xpose.msra.mxu0 0.0
    %1239 = vmatpush.xpose.msra.mxu0 0.0
    %1240 = vmatpush.xpose.msra.mxu0 0.0
    %1241 = vmatpush.xpose.msra.mxu0 0.0
    %1242 = vmatpush.xpose.msra.mxu0 0.0
    %1243 = vmatpush.xpose.msra.mxu0 0.0
    %1244 = vmatpush.xpose.msra.mxu0 0.0
    %1245 = vmatpush.xpose.msra.mxu0 0.0
    %1246 = vmatpush.xpose.msra.mxu0 0.0
    %1247 = vmatpush.xpose.msra.mxu0 0.0
    %1248 = vmatpush.xpose.msra.mxu0 0.0
    %1249 = vmatpush.xpose.msra.mxu0 0.0
    %1250 = vmatpush.xpose.msra.mxu0 0.0
    %1251 = vmatpush.xpose.msra.mxu0 0.0
    %1252 = vmatpush.xpose.msra.mxu0 0.0
    %1253 = vmatpush.xpose.msra.mxu0 %v1236
    %1254 = vmatmul.f32.gmra.mxu0 %v1234
    %v1255 = vpop.f32.mrf.mxu0
    %v1256 = vadd.f32 %v49, %v1255
    %1257 = vdwg.mxu0
    %v1258 = vsel %vm159, %v1228, -inf
    %1259 = vmax.xlane.f32.xlu0 %v1258
    %v1260 = vpop.xlane.xlu0 %1259
    %v1261 = vsel %vm159, %v1256, -inf
    %1262 = vmax.xlane.f32.xlu0 %v1261
    %v1263 = vpop.xlane.xlu0 %1262
    %v1264 = vsub.f32 %v1228, %v1260
    %v1265 = vsub.f32 %v1256, %v1263
    %v1266 = vmul.f32 %v1264, 1.442695
    %v1267 = vpow.pop %v1266
    %v1268 = vmul.f32 %v1265, 1.442695
    %v1269 = vpow.pop %v1268
    %v1270 = vsel %vm159, %v1267, 0.0
    %1271 = vadd.xlane.f32.xlu0 %v1270
    %v1272 = vpop.xlane.xlu0 %1271
    %v1273 = vsel %vm159, %v1269, 0.0
    %1274 = vadd.xlane.f32.xlu0 %v1273
    %v1275 = vpop.xlane.xlu0 %1274
    %v1276 = vrcp.pop %v1272
    %v1277 = vrcp.pop %v1275
    %v1278 = vmul.f32 %v1267, %v1276
    %v1279 = vmul.f32 %v1269, %v1277
    %1280 = vrot.lane.b32.xlu0 %v1060, 56
    %v1281 = vpop.permute.xlu0 %1280
    %v1284 = vsel %vm159, %v1278, 0
    %1286 = vmatpush.msra.mxu0 0.0
    %1287 = vmatpush.msra.mxu0 0.0
    %1288 = vmatpush.msra.mxu0 0.0
    %1289 = vmatpush.msra.mxu0 0.0
    %1290 = vmatpush.msra.mxu0 0.0
    %1291 = vmatpush.msra.mxu0 0.0
    %1292 = vmatpush.msra.mxu0 0.0
    %1293 = vmatpush.msra.mxu0 0.0
    %1294 = vmatpush.msra.mxu0 0.0
    %1295 = vmatpush.msra.mxu0 0.0
    %1296 = vmatpush.msra.mxu0 0.0
    %1297 = vmatpush.msra.mxu0 0.0
    %1298 = vmatpush.msra.mxu0 0.0
    %1299 = vmatpush.msra.mxu0 0.0
    %1300 = vmatpush.msra.mxu0 0.0
    %1301 = vmatpush.msra.mxu0 %v1281
    %1302 = vmatmul.f32.gmra.mxu0 %v1284
    %v1303 = vpop.f32.mrf.mxu0
    %v1304 = vadd.f32 0.0, %v1303
    %1305 = vdwg.mxu0
    %1306 = vrot.lane.b32.xlu0 %v1063, 56
    %v1307 = vpop.permute.xlu0 %1306
    %v1310 = vsel %vm159, %v1279, 0
    %1312 = vmatpush.msra.mxu0 0.0
    %1313 = vmatpush.msra.mxu0 0.0
    %1314 = vmatpush.msra.mxu0 0.0
    %1315 = vmatpush.msra.mxu0 0.0
    %1316 = vmatpush.msra.mxu0 0.0
    %1317 = vmatpush.msra.mxu0 0.0
    %1318 = vmatpush.msra.mxu0 0.0
    %1319 = vmatpush.msra.mxu0 0.0
    %1320 = vmatpush.msra.mxu0 0.0
    %1321 = vmatpush.msra.mxu0 0.0
    %1322 = vmatpush.msra.mxu0 0.0
    %1323 = vmatpush.msra.mxu0 0.0
    %1324 = vmatpush.msra.mxu0 0.0
    %1325 = vmatpush.msra.mxu0 0.0
    %1326 = vmatpush.msra.mxu0 0.0
    %1327 = vmatpush.msra.mxu0 %v1307
    %1328 = vmatmul.f32.gmra.mxu0 %v1310
    %v1329 = vpop.f32.mrf.mxu0
    %v1330 = vadd.f32 0.0, %v1329
    %1331 = vdwg.mxu0
    %v1333 = vsel %vm159, %v1304, 0
    %v1336 = vsel %vm159, %v1330, 0
    %1338 = vmatpush.msra.mxu0 0.0
    %1339 = vmatpush.msra.mxu0 0.0
    %1340 = vmatpush.msra.mxu0 0.0
    %1341 = vmatpush.msra.mxu0 0.0
    %1342 = vmatpush.msra.mxu0 0.0
    %1343 = vmatpush.msra.mxu0 0.0
    %1344 = vmatpush.msra.mxu0 0.0
    %1345 = vmatpush.msra.mxu0 0.0
    %1346 = vmatpush.msra.mxu0 0.0
    %1347 = vmatpush.msra.mxu0 0.0
    %1348 = vmatpush.msra.mxu0 0.0
    %1349 = vmatpush.msra.mxu0 0.0
    %1350 = vmatpush.msra.mxu0 0.0
    %1351 = vmatpush.msra.mxu0 0.0
    %1352 = vmatpush.msra.mxu0 0.0
    %1353 = vmatpush.msra.mxu0 %v1069
    %1354 = vmatmul.f32.gmra.mxu0 %v1333
    %v1355 = vpop.f32.mrf.mxu0
    %v1356 = vadd.f32 0.0, %v1355
    %1357 = vmatmul.f32.gmra.mxu0 %v1336
    %v1358 = vpop.f32.mrf.mxu0
    %v1359 = vadd.f32 0.0, %v1358
    %1360 = vdwg.mxu0
    %v1362 = vsel %vm159, %v1174, 0
    %v1365 = vsel %vm159, %v1200, 0
    %1367 = vmatpush.msra.mxu0 0.0
    %1368 = vmatpush.msra.mxu0 0.0
    %1369 = vmatpush.msra.mxu0 0.0
    %1370 = vmatpush.msra.mxu0 0.0
    %1371 = vmatpush.msra.mxu0 0.0
    %1372 = vmatpush.msra.mxu0 0.0
    %1373 = vmatpush.msra.mxu0 0.0
    %1374 = vmatpush.msra.mxu0 0.0
    %1375 = vmatpush.msra.mxu0 0.0
    %1376 = vmatpush.msra.mxu0 0.0
    %1377 = vmatpush.msra.mxu0 0.0
    %1378 = vmatpush.msra.mxu0 0.0
    %1379 = vmatpush.msra.mxu0 0.0
    %1380 = vmatpush.msra.mxu0 0.0
    %1381 = vmatpush.msra.mxu0 0.0
    %1382 = vmatpush.msra.mxu0 %v1068
    %1383 = vmatmul.f32.gmra.mxu0 %v1362
    %v1384 = vpop.f32.mrf.mxu0
    %v1385 = vadd.f32 %v1356, %v1384
    %1386 = vmatmul.f32.gmra.mxu0 %v1365
    %v1387 = vpop.f32.mrf.mxu0
    %v1388 = vadd.f32 %v1359, %v1387
    %1389 = vdwg.mxu0
    %1390 = vrot.lane.b32.xlu0 %v1065, 112
    %v1391 = vpop.permute.xlu0 %1390
    %1392 = vrot.lane.b32.xlu0 %v1060, 80
    %v1393 = vpop.permute.xlu0 %1392
    %v1394 = vsel %vm159, %v1391, 0
    %v1396 = vsel %vm159, %v1393, 0
    %1398 = vmatpush.xpose.msra.mxu0 0.0
    %1399 = vmatpush.xpose.msra.mxu0 0.0
    %1400 = vmatpush.xpose.msra.mxu0 0.0
    %1401 = vmatpush.xpose.msra.mxu0 0.0
    %1402 = vmatpush.xpose.msra.mxu0 0.0
    %1403 = vmatpush.xpose.msra.mxu0 0.0
    %1404 = vmatpush.xpose.msra.mxu0 0.0
    %1405 = vmatpush.xpose.msra.mxu0 0.0
    %1406 = vmatpush.xpose.msra.mxu0 0.0
    %1407 = vmatpush.xpose.msra.mxu0 0.0
    %1408 = vmatpush.xpose.msra.mxu0 0.0
    %1409 = vmatpush.xpose.msra.mxu0 0.0
    %1410 = vmatpush.xpose.msra.mxu0 0.0
    %1411 = vmatpush.xpose.msra.mxu0 0.0
    %1412 = vmatpush.xpose.msra.mxu0 0.0
    %1413 = vmatpush.xpose.msra.mxu0 %v1396
    %1414 = vmatmul.f32.gmra.mxu0 %v1394
    %v1415 = vpop.f32.mrf.mxu0
    %v1416 = vadd.f32 %v49, %v1415
    %1417 = vdwg.mxu0
    %1418 = vrot.lane.b32.xlu0 %v1066, 112
    %v1419 = vpop.permute.xlu0 %1418
    %1420 = vrot.lane.b32.xlu0 %v1063, 80
    %v1421 = vpop.permute.xlu0 %1420
    %v1422 = vsel %vm159, %v1419, 0
    %v1424 = vsel %vm159, %v1421, 0
    %1426 = vmatpush.xpose.msra.mxu0 0.0
    %1427 = vmatpush.xpose.msra.mxu0 0.0
    %1428 = vmatpush.xpose.msra.mxu0 0.0
    %1429 = vmatpush.xpose.msra.mxu0 0.0
    %1430 = vmatpush.xpose.msra.mxu0 0.0
    %1431 = vmatpush.xpose.msra.mxu0 0.0
    %1432 = vmatpush.xpose.msra.mxu0 0.0
    %1433 = vmatpush.xpose.msra.mxu0 0.0
    %1434 = vmatpush.xpose.msra.mxu0 0.0
    %1435 = vmatpush.xpose.msra.mxu0 0.0
    %1436 = vmatpush.xpose.msra.mxu0 0.0
    %1437 = vmatpush.xpose.msra.mxu0 0.0
    %1438 = vmatpush.xpose.msra.mxu0 0.0
    %1439 = vmatpush.xpose.msra.mxu0 0.0
    %1440 = vmatpush.xpose.msra.mxu0 0.0
    %1441 = vmatpush.xpose.msra.mxu0 %v1424
    %1442 = vmatmul.f32.gmra.mxu0 %v1422
    %v1443 = vpop.f32.mrf.mxu0
    %v1444 = vadd.f32 %v49, %v1443
    %1445 = vdwg.mxu0
    %v1446 = vsel %vm159, %v1416, -inf
    %1447 = vmax.xlane.f32.xlu0 %v1446
    %v1448 = vpop.xlane.xlu0 %1447
    %v1449 = vsel %vm159, %v1444, -inf
    %1450 = vmax.xlane.f32.xlu0 %v1449
    %v1451 = vpop.xlane.xlu0 %1450
    %v1452 = vsub.f32 %v1416, %v1448
    %v1453 = vsub.f32 %v1444, %v1451
    %v1454 = vmul.f32 %v1452, 1.442695
    %v1455 = vpow.pop %v1454
    %v1456 = vmul.f32 %v1453, 1.442695
    %v1457 = vpow.pop %v1456
    %v1458 = vsel %vm159, %v1455, 0.0
    %1459 = vadd.xlane.f32.xlu0 %v1458
    %v1460 = vpop.xlane.xlu0 %1459
    %v1461 = vsel %vm159, %v1457, 0.0
    %1462 = vadd.xlane.f32.xlu0 %v1461
    %v1463 = vpop.xlane.xlu0 %1462
    %v1464 = vrcp.pop %v1460
    %v1465 = vrcp.pop %v1463
    %v1466 = vmul.f32 %v1455, %v1464
    %v1467 = vmul.f32 %v1457, %v1465
    %1468 = vrot.lane.b32.xlu0 %v1060, 48
    %v1469 = vpop.permute.xlu0 %1468
    %v1472 = vsel %vm159, %v1466, 0
    %1474 = vmatpush.msra.mxu0 0.0
    %1475 = vmatpush.msra.mxu0 0.0
    %1476 = vmatpush.msra.mxu0 0.0
    %1477 = vmatpush.msra.mxu0 0.0
    %1478 = vmatpush.msra.mxu0 0.0
    %1479 = vmatpush.msra.mxu0 0.0
    %1480 = vmatpush.msra.mxu0 0.0
    %1481 = vmatpush.msra.mxu0 0.0
    %1482 = vmatpush.msra.mxu0 0.0
    %1483 = vmatpush.msra.mxu0 0.0
    %1484 = vmatpush.msra.mxu0 0.0
    %1485 = vmatpush.msra.mxu0 0.0
    %1486 = vmatpush.msra.mxu0 0.0
    %1487 = vmatpush.msra.mxu0 0.0
    %1488 = vmatpush.msra.mxu0 0.0
    %1489 = vmatpush.msra.mxu0 %v1469
    %1490 = vmatmul.f32.gmra.mxu0 %v1472
    %v1491 = vpop.f32.mrf.mxu0
    %v1492 = vadd.f32 0.0, %v1491
    %1493 = vdwg.mxu0
    %1494 = vrot.lane.b32.xlu0 %v1063, 48
    %v1495 = vpop.permute.xlu0 %1494
    %v1498 = vsel %vm159, %v1467, 0
    %1500 = vmatpush.msra.mxu0 0.0
    %1501 = vmatpush.msra.mxu0 0.0
    %1502 = vmatpush.msra.mxu0 0.0
    %1503 = vmatpush.msra.mxu0 0.0
    %1504 = vmatpush.msra.mxu0 0.0
    %1505 = vmatpush.msra.mxu0 0.0
    %1506 = vmatpush.msra.mxu0 0.0
    %1507 = vmatpush.msra.mxu0 0.0
    %1508 = vmatpush.msra.mxu0 0.0
    %1509 = vmatpush.msra.mxu0 0.0
    %1510 = vmatpush.msra.mxu0 0.0
    %1511 = vmatpush.msra.mxu0 0.0
    %1512 = vmatpush.msra.mxu0 0.0
    %1513 = vmatpush.msra.mxu0 0.0
    %1514 = vmatpush.msra.mxu0 0.0
    %1515 = vmatpush.msra.mxu0 %v1495
    %1516 = vmatmul.f32.gmra.mxu0 %v1498
    %v1517 = vpop.f32.mrf.mxu0
    %v1518 = vadd.f32 0.0, %v1517
    %1519 = vdwg.mxu0
    %v1521 = vsel %vm159, %v1492, 0
    %v1524 = vsel %vm159, %v1518, 0
    %1526 = vmatpush.msra.mxu0 0.0
    %1527 = vmatpush.msra.mxu0 0.0
    %1528 = vmatpush.msra.mxu0 0.0
    %1529 = vmatpush.msra.mxu0 0.0
    %1530 = vmatpush.msra.mxu0 0.0
    %1531 = vmatpush.msra.mxu0 0.0
    %1532 = vmatpush.msra.mxu0 0.0
    %1533 = vmatpush.msra.mxu0 0.0
    %1534 = vmatpush.msra.mxu0 0.0
    %1535 = vmatpush.msra.mxu0 0.0
    %1536 = vmatpush.msra.mxu0 0.0
    %1537 = vmatpush.msra.mxu0 0.0
    %1538 = vmatpush.msra.mxu0 0.0
    %1539 = vmatpush.msra.mxu0 0.0
    %1540 = vmatpush.msra.mxu0 0.0
    %1541 = vmatpush.msra.mxu0 %v1070
    %1542 = vmatmul.f32.gmra.mxu0 %v1521
    %v1543 = vpop.f32.mrf.mxu0
    %v1544 = vadd.f32 0.0, %v1543
    %1545 = vmatmul.f32.gmra.mxu0 %v1524
    %v1546 = vpop.f32.mrf.mxu0
    %v1547 = vadd.f32 0.0, %v1546
    %1548 = vdwg.mxu0
    %v1549 = vadd.f32 %v1385, %v1544
    %v1550 = vadd.f32 %v1388, %v1547
    %1551 = vrot.lane.b32.xlu0 %v1065, 104
    %v1552 = vpop.permute.xlu0 %1551
    %1553 = vrot.lane.b32.xlu0 %v1060, 72
    %v1554 = vpop.permute.xlu0 %1553
    %v1555 = vsel %vm159, %v1552, 0
    %v1557 = vsel %vm159, %v1554, 0
    %1559 = vmatpush.xpose.msra.mxu0 0.0
    %1560 = vmatpush.xpose.msra.mxu0 0.0
    %1561 = vmatpush.xpose.msra.mxu0 0.0
    %1562 = vmatpush.xpose.msra.mxu0 0.0
    %1563 = vmatpush.xpose.msra.mxu0 0.0
    %1564 = vmatpush.xpose.msra.mxu0 0.0
    %1565 = vmatpush.xpose.msra.mxu0 0.0
    %1566 = vmatpush.xpose.msra.mxu0 0.0
    %1567 = vmatpush.xpose.msra.mxu0 0.0
    %1568 = vmatpush.xpose.msra.mxu0 0.0
    %1569 = vmatpush.xpose.msra.mxu0 0.0
    %1570 = vmatpush.xpose.msra.mxu0 0.0
    %1571 = vmatpush.xpose.msra.mxu0 0.0
    %1572 = vmatpush.xpose.msra.mxu0 0.0
    %1573 = vmatpush.xpose.msra.mxu0 0.0
    %1574 = vmatpush.xpose.msra.mxu0 %v1557
    %1575 = vmatmul.f32.gmra.mxu0 %v1555
    %v1576 = vpop.f32.mrf.mxu0
    %v1577 = vadd.f32 %v49, %v1576
    %1578 = vdwg.mxu0
    %1579 = vrot.lane.b32.xlu0 %v1066, 104
    %v1580 = vpop.permute.xlu0 %1579
    %1581 = vrot.lane.b32.xlu0 %v1063, 72
    %v1582 = vpop.permute.xlu0 %1581
    %v1583 = vsel %vm159, %v1580, 0
    %v1585 = vsel %vm159, %v1582, 0
    %1587 = vmatpush.xpose.msra.mxu0 0.0
    %1588 = vmatpush.xpose.msra.mxu0 0.0
    %1589 = vmatpush.xpose.msra.mxu0 0.0
    %1590 = vmatpush.xpose.msra.mxu0 0.0
    %1591 = vmatpush.xpose.msra.mxu0 0.0
    %1592 = vmatpush.xpose.msra.mxu0 0.0
    %1593 = vmatpush.xpose.msra.mxu0 0.0
    %1594 = vmatpush.xpose.msra.mxu0 0.0
    %1595 = vmatpush.xpose.msra.mxu0 0.0
    %1596 = vmatpush.xpose.msra.mxu0 0.0
    %1597 = vmatpush.xpose.msra.mxu0 0.0
    %1598 = vmatpush.xpose.msra.mxu0 0.0
    %1599 = vmatpush.xpose.msra.mxu0 0.0
    %1600 = vmatpush.xpose.msra.mxu0 0.0
    %1601 = vmatpush.xpose.msra.mxu0 0.0
    %1602 = vmatpush.xpose.msra.mxu0 %v1585
    %1603 = vmatmul.f32.gmra.mxu0 %v1583
    %v1604 = vpop.f32.mrf.mxu0
    %v1605 = vadd.f32 %v49, %v1604
    %1606 = vdwg.mxu0
    %v1607 = vsel %vm159, %v1577, -inf
    %1608 = vmax.xlane.f32.xlu0 %v1607
    %v1609 = vpop.xlane.xlu0 %1608
    %v1610 = vsel %vm159, %v1605, -inf
    %1611 = vmax.xlane.f32.xlu0 %v1610
    %v1612 = vpop.xlane.xlu0 %1611
    %v1613 = vsub.f32 %v1577, %v1609
    %v1614 = vsub.f32 %v1605, %v1612
    %v1615 = vmul.f32 %v1613, 1.442695
    %v1616 = vpow.pop %v1615
    %v1617 = vmul.f32 %v1614, 1.442695
    %v1618 = vpow.pop %v1617
    %v1619 = vsel %vm159, %v1616, 0.0
    %1620 = vadd.xlane.f32.xlu0 %v1619
    %v1621 = vpop.xlane.xlu0 %1620
    %v1622 = vsel %vm159, %v1618, 0.0
    %1623 = vadd.xlane.f32.xlu0 %v1622
    %v1624 = vpop.xlane.xlu0 %1623
    %v1625 = vrcp.pop %v1621
    %v1626 = vrcp.pop %v1624
    %v1627 = vmul.f32 %v1616, %v1625
    %v1628 = vmul.f32 %v1618, %v1626
    %1629 = vrot.lane.b32.xlu0 %v1060, 40
    %v1630 = vpop.permute.xlu0 %1629
    %v1633 = vsel %vm159, %v1627, 0
    %1635 = vmatpush.msra.mxu0 0.0
    %1636 = vmatpush.msra.mxu0 0.0
    %1637 = vmatpush.msra.mxu0 0.0
    %1638 = vmatpush.msra.mxu0 0.0
    %1639 = vmatpush.msra.mxu0 0.0
    %1640 = vmatpush.msra.mxu0 0.0
    %1641 = vmatpush.msra.mxu0 0.0
    %1642 = vmatpush.msra.mxu0 0.0
    %1643 = vmatpush.msra.mxu0 0.0
    %1644 = vmatpush.msra.mxu0 0.0
    %1645 = vmatpush.msra.mxu0 0.0
    %1646 = vmatpush.msra.mxu0 0.0
    %1647 = vmatpush.msra.mxu0 0.0
    %1648 = vmatpush.msra.mxu0 0.0
    %1649 = vmatpush.msra.mxu0 0.0
    %1650 = vmatpush.msra.mxu0 %v1630
    %1651 = vmatmul.f32.gmra.mxu0 %v1633
    %v1652 = vpop.f32.mrf.mxu0
    %v1653 = vadd.f32 0.0, %v1652
    %1654 = vdwg.mxu0
    %1655 = vrot.lane.b32.xlu0 %v1063, 40
    %v1656 = vpop.permute.xlu0 %1655
    %v1659 = vsel %vm159, %v1628, 0
    %1661 = vmatpush.msra.mxu0 0.0
    %1662 = vmatpush.msra.mxu0 0.0
    %1663 = vmatpush.msra.mxu0 0.0
    %1664 = vmatpush.msra.mxu0 0.0
    %1665 = vmatpush.msra.mxu0 0.0
    %1666 = vmatpush.msra.mxu0 0.0
    %1667 = vmatpush.msra.mxu0 0.0
    %1668 = vmatpush.msra.mxu0 0.0
    %1669 = vmatpush.msra.mxu0 0.0
    %1670 = vmatpush.msra.mxu0 0.0
    %1671 = vmatpush.msra.mxu0 0.0
    %1672 = vmatpush.msra.mxu0 0.0
    %1673 = vmatpush.msra.mxu0 0.0
    %1674 = vmatpush.msra.mxu0 0.0
    %1675 = vmatpush.msra.mxu0 0.0
    %1676 = vmatpush.msra.mxu0 %v1656
    %1677 = vmatmul.f32.gmra.mxu0 %v1659
    %v1678 = vpop.f32.mrf.mxu0
    %v1679 = vadd.f32 0.0, %v1678
    %1680 = vdwg.mxu0
    %v1682 = vsel %vm159, %v1653, 0
    %v1685 = vsel %vm159, %v1679, 0
    %1687 = vmatpush.msra.mxu0 0.0
    %1688 = vmatpush.msra.mxu0 0.0
    %1689 = vmatpush.msra.mxu0 0.0
    %1690 = vmatpush.msra.mxu0 0.0
    %1691 = vmatpush.msra.mxu0 0.0
    %1692 = vmatpush.msra.mxu0 0.0
    %1693 = vmatpush.msra.mxu0 0.0
    %1694 = vmatpush.msra.mxu0 0.0
    %1695 = vmatpush.msra.mxu0 0.0
    %1696 = vmatpush.msra.mxu0 0.0
    %1697 = vmatpush.msra.mxu0 0.0
    %1698 = vmatpush.msra.mxu0 0.0
    %1699 = vmatpush.msra.mxu0 0.0
    %1700 = vmatpush.msra.mxu0 0.0
    %1701 = vmatpush.msra.mxu0 0.0
    %1702 = vmatpush.msra.mxu0 %v1071
    %1703 = vmatmul.f32.gmra.mxu0 %v1682
    %v1704 = vpop.f32.mrf.mxu0
    %v1705 = vadd.f32 0.0, %v1704
    %1706 = vmatmul.f32.gmra.mxu0 %v1685
    %v1707 = vpop.f32.mrf.mxu0
    %v1708 = vadd.f32 0.0, %v1707
    %1709 = vdwg.mxu0
    %v1710 = vadd.f32 %v1549, %v1705
    %v1711 = vadd.f32 %v1550, %v1708
    %v1712 = vadd.f32 %v968, %v1710
    %v1713 = vadd.f32 %v969, %v1711
    %v1714 = vperm.slane %v973, 0
    %v1715 = vadd.f32 %v1712, %v1714
    %v1716 = vadd.f32 %v1713, %v1714
    %v1717 = vsel %vm58, %v1715, 0.0
    %1718 = vadd.xlane.f32.xlu0 %v1717
    %v1719 = vpop.xlane.xlu0 %1718
    %v1720 = vsel %vm58, %v1716, 0.0
    %1721 = vadd.xlane.f32.xlu0 %v1720
    %v1722 = vpop.xlane.xlu0 %1721
    %v1723 = vmul.f32 %v1719, %v71
    %v1724 = vmul.f32 %v1722, %v71
    %v1725 = vsub.f32 %v1715, %v1723
    %v1726 = vsub.f32 %v1716, %v1724
    %v1727 = vmul.f32 %v1725, %v1725
    %v1728 = vmul.f32 %v1726, %v1726
    %v1729 = vsel %vm58, %v1727, 0.0
    %1730 = vadd.xlane.f32.xlu0 %v1729
    %v1731 = vpop.xlane.xlu0 %1730
    %v1732 = vsel %vm58, %v1728, 0.0
    %1733 = vadd.xlane.f32.xlu0 %v1732
    %v1734 = vpop.xlane.xlu0 %1733
    %v1735 = vmul.f32 %v1731, %v71
    %v1736 = vmul.f32 %v1734, %v71
    %v1737 = vadd.f32 %v1735, 1e-05
    %v1738 = vadd.f32 %v1736, 1e-05
    %v1739 = vrsqrt.pop %v1737
    %v1740 = vmul.f32 %v1739, %v1737
    %v1741 = vmul.f32 %v1740, %v1739
    %v1742 = vmul.f32 0.5, %v1741
    %v1743 = vsub.f32 1.5, %v1742
    %v1744 = vmul.f32 %v1739, %v1743
    %vm1745 = vweird.f32 %v1737
    %vm1746 = vweird.f32 %v1739
    %vm1747 = vmor %vm1745, %vm1746
    %v1748 = vsel %vm1747, %v1739, %v1744
    %v1749 = vrsqrt.pop %v1738
    %v1750 = vmul.f32 %v1749, %v1738
    %v1751 = vmul.f32 %v1750, %v1749
    %v1752 = vmul.f32 0.5, %v1751
    %v1753 = vsub.f32 1.5, %v1752
    %v1754 = vmul.f32 %v1749, %v1753
    %vm1755 = vweird.f32 %v1738
    %vm1756 = vweird.f32 %v1749
    %vm1757 = vmor %vm1755, %vm1756
    %v1758 = vsel %vm1757, %v1749, %v1754
    %v1759 = vmul.f32 %v1725, %v1748
    %v1760 = vmul.f32 %v1726, %v1758
    %v1761 = vperm.slane %v974, 0
    %v1762 = vmul.f32 %v1759, %v1761
    %v1763 = vmul.f32 %v1760, %v1761
    %v1764 = vperm.slane %v975, 0
    %v1765 = vadd.f32 %v1762, %v1764
    %v1766 = vadd.f32 %v1763, %v1764
    %s1767 = scalar_lea.vmem %s4, 32
    %v1768 = vld [vmem:[%s1767] sm:$0xff]
    %v1769 = vld [vmem:[%s1767 + $0x8] sm:$0xff]
    %v1770 = vld [vmem:[%s1767 + $0x10] sm:$0xff]
    %v1771 = vld [vmem:[%s1767 + $0x18] sm:$0xff]
    %v1772 = vperm.slane %v979, 0
    %v1774 = vsel %vm58, %v1765, 0
    %v1777 = vsel %vm58, %v1766, 0
    %1779 = vmatpush.msra.mxu0 0.0
    %1780 = vmatpush.msra.mxu0 0.0
    %1781 = vmatpush.msra.mxu0 0.0
    %1782 = vmatpush.msra.mxu0 0.0
    %1783 = vmatpush.msra.mxu0 0.0
    %1784 = vmatpush.msra.mxu0 0.0
    %1785 = vmatpush.msra.mxu0 0.0
    %1786 = vmatpush.msra.mxu0 0.0
    %1787 = vmatpush.msra.mxu0 0.0
    %1788 = vmatpush.msra.mxu0 0.0
    %1789 = vmatpush.msra.mxu0 0.0
    %1790 = vmatpush.msra.mxu0 0.0
    %1791 = vmatpush.msra.mxu0 %v1771
    %1792 = vmatpush.msra.mxu0 %v1770
    %1793 = vmatpush.msra.mxu0 %v1769
    %1794 = vmatpush.msra.mxu0 %v1768
    %1795 = vmatmul.f32.gmra.mxu0 %v1774
    %v1796 = vpop.f32.mrf.mxu0
    %v1797 = vadd.f32 %v1772, %v1796
    %1798 = vmatmul.f32.gmra.mxu0 %v1777
    %v1799 = vpop.f32.mrf.mxu0
    %v1800 = vadd.f32 %v1772, %v1799
    %1801 = vdwg.mxu0
    %v1802 = vmul.f32 %v1797, 1.702
    %v1803 = vmul.f32 %v1800, 1.702
    %v1804 = vxor.u32 %v1802, 2147483648
    %v1805 = vxor.u32 %v1803, 2147483648
    %v1806 = vmul.f32 %v1804, 1.442695
    %v1807 = vpow.pop %v1806
    %v1808 = vmul.f32 %v1805, 1.442695
    %v1809 = vpow.pop %v1808
    %v1810 = vadd.f32 %v1807, 1.0
    %v1811 = vadd.f32 %v1809, 1.0
    %v1812 = vrcp.pop %v1810
    %v1813 = vmul.f32 %v1810, %v1812
    %v1814 = vsub.f32 1.0, %v1813
    %v1815 = vmul.f32 %v1812, %v1814
    %v1816 = vadd.f32 %v1812, %v1815
    %vm1817 = vweird.f32 %v1810
    %vm1818 = vweird.f32 %v1812
    %vm1819 = vmor %vm1817, %vm1818
    %v1820 = vsel %vm1819, %v1812, %v1816
    %v1821 = vand.u32 2147483647, %v1810
    %vm1822 = vcmp.eq.f32.partialorder %v1821, 8.507059e+37
    %v1823 = vand.u32 %v1810, 2147483648
    %v1824 = vor.u32 1.1754944e-38, %v1823
    %v1825 = vsel %vm1822, %v1824, %v1820
    %v1826 = vmul.f32 1.0, %v1825
    %v1827 = vrcp.pop %v1811
    %v1828 = vmul.f32 %v1811, %v1827
    %v1829 = vsub.f32 1.0, %v1828
    %v1830 = vmul.f32 %v1827, %v1829
    %v1831 = vadd.f32 %v1827, %v1830
    %vm1832 = vweird.f32 %v1811
    %vm1833 = vweird.f32 %v1827
    %vm1834 = vmor %vm1832, %vm1833
    %v1835 = vsel %vm1834, %v1827, %v1831
    %v1836 = vand.u32 2147483647, %v1811
    %vm1837 = vcmp.eq.f32.partialorder %v1836, 8.507059e+37
    %v1838 = vand.u32 %v1811, 2147483648
    %v1839 = vor.u32 1.1754944e-38, %v1838
    %v1840 = vsel %vm1837, %v1839, %v1835
    %v1841 = vmul.f32 1.0, %v1840
    %v1842 = vmul.f32 %v1797, %v1826
    %v1843 = vmul.f32 %v1800, %v1841
    %s1844 = scalar_lea.vmem %s5, 128
    %v1845 = vld [vmem:[%s1844] sm:$0xff]
    %v1846 = vld [vmem:[%s1844 + $0x8] sm:$0xff]
    %v1847 = vld [vmem:[%s1844 + $0x10] sm:$0xff]
    %v1848 = vld [vmem:[%s1844 + $0x18] sm:$0xff]
    %v1849 = vld [vmem:[%s1844 + $0x20] sm:$0xff]
    %v1850 = vld [vmem:[%s1844 + $0x28] sm:$0xff]
    %v1851 = vld [vmem:[%s1844 + $0x30] sm:$0xff]
    %v1852 = vld [vmem:[%s1844 + $0x38] sm:$0xff]
    %v1853 = vld [vmem:[%s1844 + $0x40] sm:$0xff]
    %v1854 = vld [vmem:[%s1844 + $0x48] sm:$0xff]
    %v1855 = vld [vmem:[%s1844 + $0x50] sm:$0xff]
    %v1856 = vld [vmem:[%s1844 + $0x58] sm:$0xff]
    %v1857 = vld [vmem:[%s1844 + $0x60] sm:$0xff]
    %v1858 = vld [vmem:[%s1844 + $0x68] sm:$0xff]
    %v1859 = vld [vmem:[%s1844 + $0x70] sm:$0xff]
    %v1860 = vld [vmem:[%s1844 + $0x78] sm:$0xff]
    %v1861 = vperm.slane %v976, 0
    %1862 = vmatpush.msra.mxu0 %v1860
    %1863 = vmatpush.msra.mxu0 %v1859
    %1864 = vmatpush.msra.mxu0 %v1858
    %1865 = vmatpush.msra.mxu0 %v1857
    %1866 = vmatpush.msra.mxu0 %v1856
    %1867 = vmatpush.msra.mxu0 %v1855
    %1868 = vmatpush.msra.mxu0 %v1854
    %1869 = vmatpush.msra.mxu0 %v1853
    %1870 = vmatpush.msra.mxu0 %v1852
    %1871 = vmatpush.msra.mxu0 %v1851
    %1872 = vmatpush.msra.mxu0 %v1850
    %1873 = vmatpush.msra.mxu0 %v1849
    %1874 = vmatpush.msra.mxu0 %v1848
    %1875 = vmatpush.msra.mxu0 %v1847
    %1876 = vmatpush.msra.mxu0 %v1846
    %1877 = vmatpush.msra.mxu0 %v1845
    %1878 = vmatmul.f32.gmra.mxu0 %v1842
    %v1879 = vpop.f32.mrf.mxu0
    %v1880 = vadd.f32 %v1861, %v1879
    %1881 = vmatmul.f32.gmra.mxu0 %v1843
    %v1882 = vpop.f32.mrf.mxu0
    %v1883 = vadd.f32 %v1861, %v1882
    %1884 = vdwg.mxu0
    %v1885 = vadd.f32 %v1715, %v1880
    %v1886 = vadd.f32 %v1716, %v1883
    %s1887 = sld [smem:[#allocation3]]
    %v1888 = vstv %s1887
    %vm1889 = vcmp.eq.s32.totalorder %v47, %v1888
    %v1890 = vsel %vm1889, 1, 0
    %v1891 = vcvt.s32.f32 %v1890
    %s1892 = sld [smem:[#allocation3 + $0x1]]
    %s1893 = sadd.s32 %s1892, 8
    %v1894 = vstv %s1893
    %vm1895 = vcmp.eq.s32.totalorder %v47, %v1894
    %v1896 = vsel %vm1895, 1, 0
    %v1897 = vcvt.s32.f32 %v1896
    %vm1898 = vcmask 1040384
    %v1899 = vsel %vm1898, %v1891, %v1897
    %vm1900 = vcmask 130048
    %v1902 = vsel %vm1900, %v1899, 0
    %1904 = vmatpush.msra.mxu0 0.0
    %1905 = vmatpush.msra.mxu0 0.0
    %1906 = vmatpush.msra.mxu0 0.0
    %1907 = vmatpush.msra.mxu0 0.0
    %1908 = vmatpush.msra.mxu0 0.0
    %1909 = vmatpush.msra.mxu0 0.0
    %1910 = vmatpush.msra.mxu0 0.0
    %1911 = vmatpush.msra.mxu0 0.0
    %1912 = vmatpush.msra.mxu0 0.0
    %1913 = vmatpush.msra.mxu0 0.0
    %1914 = vmatpush.msra.mxu0 0.0
    %1915 = vmatpush.msra.mxu0 0.0
    %1916 = vmatpush.msra.mxu0 0.0
    %1917 = vmatpush.msra.mxu0 0.0
    %1918 = vmatpush.msra.mxu0 %v1886
    %1919 = vmatpush.msra.mxu0 %v1885
    %1920 = vmatmul.f32.gmra.mxu0 %v1902
    %v1921 = vpop.f32.mrf.mxu0
    %v1922 = vadd.f32 0.0, %v1921
    %1923 = vdwg.mxu0
    %v1924 = vld [vmem:[%s8] sm:$0x1]
    %v1925 = vld [vmem:[%s8 + $0x1] sm:$0x1]
    %vm1926 = vcmask 254976
    %v1927 = vsel %vm1926, %v1922, 0.0
    %1928 = vadd.xlane.f32.xlu0 %v1927
    %v1929 = vpop.xlane.xlu0 %1928
    %v1930 = vmul.f32 %v1929, %v71
    %v1931 = vsub.f32 %v1922, %v1930
    %v1932 = vmul.f32 %v1931, %v1931
    %v1933 = vsel %vm1926, %v1932, 0.0
    %1934 = vadd.xlane.f32.xlu0 %v1933
    %v1935 = vpop.xlane.xlu0 %1934
    %v1936 = vmul.f32 %v1935, %v71
    %v1937 = vadd.f32 %v1936, 1e-05
    %v1938 = vrsqrt.pop %v1937
    %v1939 = vmul.f32 %v1938, %v1937
    %v1940 = vmul.f32 %v1939, %v1938
    %v1941 = vmul.f32 0.5, %v1940
    %v1942 = vsub.f32 1.5, %v1941
    %v1943 = vmul.f32 %v1938, %v1942
    %vm1944 = vweird.f32 %v1937
    %vm1945 = vweird.f32 %v1938
    %vm1946 = vmor %vm1944, %vm1945
    %v1947 = vsel %vm1946, %v1938, %v1943
    %v1948 = vmul.f32 %v1931, %v1947
    %v1949 = vperm.slane %v1924, 0
    %v1950 = vmul.f32 %v1948, %v1949
    %v1951 = vperm.slane %v1925, 0
    %v1952 = vadd.f32 %v1950, %v1951
    %v1953 = vld [vmem:[%s9] sm:$0xff]
    %v1954 = vld [vmem:[%s9 + $0x8] sm:$0xff]
    %v1955 = vld [vmem:[%s9 + $0x10] sm:$0xff]
    %v1956 = vld [vmem:[%s9 + $0x18] sm:$0xff]
    %v1958 = vsel %vm58, %v1952, 0
    %1960 = vmatpush.msra.mxu0 0.0
    %1961 = vmatpush.msra.mxu0 0.0
    %1962 = vmatpush.msra.mxu0 0.0
    %1963 = vmatpush.msra.mxu0 0.0
    %1964 = vmatpush.msra.mxu0 0.0
    %1965 = vmatpush.msra.mxu0 0.0
    %1966 = vmatpush.msra.mxu0 0.0
    %1967 = vmatpush.msra.mxu0 0.0
    %1968 = vmatpush.msra.mxu0 0.0
    %1969 = vmatpush.msra.mxu0 0.0
    %1970 = vmatpush.msra.mxu0 0.0
    %1971 = vmatpush.msra.mxu0 0.0
    %1972 = vmatpush.msra.mxu0 %v1956
    %1973 = vmatpush.msra.mxu0 %v1955
    %1974 = vmatpush.msra.mxu0 %v1954
    %1975 = vmatpush.msra.mxu0 %v1953
    %1976 = vmatmul.f32.gmra.mxu0 %v1958
    %v1977 = vpop.f32.mrf.mxu0
    %v1978 = vadd.f32 0.0, %v1977
    %1979 = vdwg.mxu0
    %vm1980 = vcmask 123904
    %1981 = vst.msk [vmem:[#allocation4] sm:$0x3] %vm1980, %v1978
    // Predicated region
    $region38: #{tpu_custom_call.1} parent=1 // pred_check
      _
    $region39: #{tpu_custom_call.1} parent=1 // pred_check_branch
      %1983 = sbr.rel (0) target = $region41
    $region40: #{tpu_custom_call.1} parent=1 // pred_region
      %1985 = vsyncadd [#allocation5], 0
      %s1987 = sshll.u32 [#allocation4], 4
      %s1988 = int_to_ptr.vmem [resolvable:$true] %s1987
      %s1989 = sshll.u32 %s10, 4
      %s1990 = int_to_ptr.hbm [resolvable:$true] %s1989
      %1992 = dma.vmem_to_hbm [thread:$0]  %s1988, 32, %s1990, [#allocation5]
    $region41: #{tpu_custom_call.1} parent=1 // pred_fallthru
      _
    // Predicated region
    $region42: #{tpu_custom_call.1} parent=1 // pred_check
      _
    $region43: #{tpu_custom_call.1} parent=1 // pred_check_branch
      %1994 = sbr.rel (0) target = $region45
    $region44: #{tpu_custom_call.1} parent=1 // pred_region
      %1996 = dma.done [#allocation5], 32
    $region45: #{tpu_custom_call.1} parent=1 // pred_fallthru
      _
    %1997 = vsyncpa [#allocation5], 1

</llo_original>
